<compile_context>
chip_gen: v5e
topology: v5e:2x2
jax: 0.10.0
libtpu: 0.0.40
codegen_flags: <defaults>
</compile_context>

<pallas_src>
import functools

import jax
import jax.numpy as jnp
from jax.experimental import pallas as pl
from jax.experimental.pallas import tpu as pltpu


HIDDEN = 128  # nn.LSTM(hidden_size=128)


def _round_up(x, m):
    return (x + m - 1) // m * m


def _lstm_kernel(xg_ref, w_hh_ref, w_fc_ref, b_fc_ref, out_ref):
    """One invocation per batch tile; the full time loop runs in-kernel.

    xg_ref   : (T, TB, 4H) precomputed x @ W_ih^T + (b_ih + b_hh), time-major
    w_hh_ref : (H, 4H)     recurrent weights (pre-transposed)
    w_fc_ref : (H, Cp)     FC weights (pre-transposed, lane-padded to 128)
    b_fc_ref : (1, Cp)     FC bias (padded lanes = -1e30 so softmax ignores them)
    out_ref  : (TB, Cp)    softmax probabilities
    """
    T, TB, _ = xg_ref.shape
    H = HIDDEN

    def step(t, carry):
        h, c = carry
        # Only the (TB, H) x (H, 4H) recurrent matmul is on the serial path;
        # the input projection + bias were hoisted out of the recurrence.
        gates = xg_ref[t] + jnp.dot(
            h, w_hh_ref[...], preferred_element_type=jnp.float32)
        # PyTorch gate order: i, f, g, o (slices at 128-lane boundaries).
        i = jax.nn.sigmoid(gates[:, 0 * H:1 * H])
        f = jax.nn.sigmoid(gates[:, 1 * H:2 * H])
        g = jnp.tanh(gates[:, 2 * H:3 * H])
        o = jax.nn.sigmoid(gates[:, 3 * H:4 * H])
        c_new = f * c + i * g
        h_new = o * jnp.tanh(c_new)
        return h_new, c_new

    h0 = jnp.zeros((TB, H), jnp.float32)
    c0 = jnp.zeros((TB, H), jnp.float32)
    h, _ = jax.lax.fori_loop(0, T, step, (h0, c0), unroll=(T <= 16))

    # Final FC + softmax: runs once per call, lane-dense 128-wide output.
    logits = (jnp.dot(h, w_fc_ref[...], preferred_element_type=jnp.float32)
              + b_fc_ref[...])
    m = jnp.max(logits, axis=1, keepdims=True)
    e = jnp.exp(logits - m)
    denom = jnp.sum(e, axis=1, keepdims=True)
    out_ref[...] = e * pl.reciprocal(denom, approx=True)


@jax.jit
def lstm_forward(x, w_ih_t, w_hh_t, b, w_fc_t, b_fc):
    """x: (B, T, D) float32. Returns softmax probs (B, num_class) float32."""
    B, T, D = x.shape
    H = HIDDEN
    C = w_fc_t.shape[1]
    assert w_ih_t.shape == (D, 4 * H) and w_hh_t.shape == (H, 4 * H)

    # (1) Hoisted input projection: one big (B*T, D) @ (D, 4H) matmul + bias,
    #     computed once outside the recurrence (MXU-efficient, not serial).
    xg = x @ w_ih_t + b                       # (B, T, 4H)
    xg = jnp.transpose(xg, (1, 0, 2))         # (T, B, 4H), time-major

    # (2) Pad batch to a sublane-friendly tile (>= 8 rows, <= 128 per tile).
    if B <= 128:
        TB = _round_up(B, 8)
        B_pad = TB
    else:
        TB = 128
        B_pad = _round_up(B, TB)
    xg = jnp.pad(xg, ((0, 0), (0, B_pad - B), (0, 0)))
    # NOTE: for very long T the (T, TB, 4H) slab should be chunked over T and
    # double-buffered (pltpu.emit_pipeline); fine in VMEM for these shapes.

    # (3) Lane-dense FC output: pad num_class to a multiple of 128 lanes.
    #     Padded logits get a -1e30 bias so they vanish under softmax.
    C_pad = _round_up(max(C, 128), 128)
    w_fc_p = jnp.pad(w_fc_t, ((0, 0), (0, C_pad - C)))
    b_fc_p = jnp.pad(b_fc, ((0, 0), (0, C_pad - C)), constant_values=-1e30)

    grid = (B_pad // TB,)  # batch tiles only; time loop is inside the kernel
    out = pl.pallas_call(
        _lstm_kernel,
        out_shape=jax.ShapeDtypeStruct((B_pad, C_pad), jnp.float32),
        grid_spec=pltpu.PrefetchScalarGridSpec(
            num_scalar_prefetch=0,
            grid=grid,
            in_specs=[
                pl.BlockSpec((T, TB, 4 * H), lambda bi: (0, bi, 0)),  # xg
                pl.BlockSpec((H, 4 * H), lambda bi: (0, 0)),          # W_hh^T
                pl.BlockSpec((H, C_pad), lambda bi: (0, 0)),          # W_fc^T
                pl.BlockSpec((1, C_pad), lambda bi: (0, 0)),          # b_fc
            ],
            out_specs=pl.BlockSpec((TB, C_pad), lambda bi: (bi, 0)),
        ),
        compiler_params=pltpu.CompilerParams(
            # batch tiles are independent -> parallel (2 TCs on v7x)
            dimension_semantics=("parallel",)),
    )(xg, w_hh_t, w_fc_p, b_fc_p)

    return out[:B, :C]


def _reference(x, w_ih_t, w_hh_t, b, w_fc_t, b_fc):
    """Pure-JAX reference matching PyTorch nn.LSTM + Linear + Softmax."""
    B, T, D = x.shape
    H = HIDDEN

    def step(carry, x_t):
        h, c = carry
        gates = x_t @ w_ih_t + h @ w_hh_t + b[0]
        i = jax.nn.sigmoid(gates[:, 0 * H:1 * H])
        f = jax.nn.sigmoid(gates[:, 1 * H:2 * H])
        g = jnp.tanh(gates[:, 2 * H:3 * H])
        o = jax.nn.sigmoid(gates[:, 3 * H:4 * H])
        c = f * c + i * g
        h = o * jnp.tanh(c)
        return (h, c), None

    (h, _), _ = jax.lax.scan(step,
                             (jnp.zeros((B, H), jnp.float32),
                              jnp.zeros((B, H), jnp.float32)),
                             jnp.transpose(x, (1, 0, 2)))
    logits = h @ w_fc_t + b_fc[0]
    return jax.nn.softmax(logits, axis=1)


if __name__ == "__main__":
    # Small shapes consistent with the module's forward.
    B, T, D = 2, 8, 32          # batch, seq, input dim
    num_class = 10
    H = HIDDEN

    key = jax.random.PRNGKey(0)
    ks = jax.random.split(key, 7)
    scale = 1.0 / jnp.sqrt(H)

    # Parameters (PyTorch stores W_ih (4H, D), W_hh (4H, H); we keep them
    # pre-transposed for right-multiplication on the MXU, and fold b_ih+b_hh).
    w_ih_t = jax.random.uniform(ks[0], (D, 4 * H), jnp.float32, -scale, scale)
    w_hh_t = jax.random.uniform(ks[1], (H, 4 * H), jnp.float32, -scale, scale)
    b_ih = jax.random.uniform(ks[2], (4 * H,), jnp.float32, -scale, scale)
    b_hh = jax.random.uniform(ks[3], (4 * H,), jnp.float32, -scale, scale)
    b = (b_ih + b_hh).reshape(1, 4 * H)
    w_fc_t = jax.random.uniform(ks[4], (H, num_class), jnp.float32, -scale, scale)
    b_fc = jax.random.uniform(ks[5], (1, num_class), jnp.float32, -scale, scale)

    x = jax.random.normal(ks[6], (B, T, D), jnp.float32)

    out = lstm_forward(x, w_ih_t, w_hh_t, b, w_fc_t, b_fc)
    out = jax.block_until_ready(out)

    ref = _reference(x, w_ih_t, w_hh_t, b, w_fc_t, b_fc)
    assert out.shape == (B, num_class)
    # Tolerance accounts for the EUP approximate-reciprocal softmax denominator.
    assert jnp.allclose(out, ref, atol=5e-4, rtol=5e-4), "mismatch vs reference"

    print("KERNEL_OK")
</pallas_src>

<mosaic_0001>
module attributes {stable_mosaic.version = 11 : i64} {
  func.func @_lstm_kernel(%arg0: i32, %arg1: memref<8x8x512xf32, #tpu.memory_space<vmem>>, %arg2: memref<128x512xf32, #tpu.memory_space<vmem>>, %arg3: memref<128x128xf32, #tpu.memory_space<vmem>>, %arg4: memref<1x128xf32, #tpu.memory_space<vmem>>, %arg5: memref<8x128xf32, #tpu.memory_space<vmem>>) attributes {dimension_semantics = [#tpu.dimension_semantics<parallel>], iteration_bounds = array<i64: 1>, scalar_prefetch = 0 : i64, scratch_operands = 0 : i64, tpu.core_type = #tpu.core_type<tc>, window_params = [{transform_indices = @transform_0, window_bounds = array<i64: 8, 8, 512>}, {pipeline_mode = #tpu.pipeline_mode<synchronous>, transform_indices = @transform_1, window_bounds = array<i64: 128, 512>}, {pipeline_mode = #tpu.pipeline_mode<synchronous>, transform_indices = @transform_2, window_bounds = array<i64: 128, 128>}, {pipeline_mode = #tpu.pipeline_mode<synchronous>, transform_indices = @transform_3, window_bounds = array<i64: 1, 128>}, {transform_indices = @transform_4, window_bounds = array<i64: 8, 128>}]} {
    %cst = arith.constant 0.000000e+00 : f32
    %0 = vector.broadcast %cst : f32 to vector<8x128xf32>
    %cst_0 = arith.constant 0.000000e+00 : f32
    %1 = vector.broadcast %cst_0 : f32 to vector<8x128xf32>
    %c0_i32 = arith.constant 0 : i32
    %2 = arith.index_cast %c0_i32 : i32 to index
    %c0 = arith.constant 0 : index
    %c0_1 = arith.constant 0 : index
    %3 = vector.load %arg1[%2, %c0, %c0_1] : memref<8x8x512xf32, #tpu.memory_space<vmem>>, vector<1x8x512xf32>
    %4 = vector.shape_cast %3 : vector<1x8x512xf32> to vector<8x512xf32>
    %c0_2 = arith.constant 0 : index
    %c0_3 = arith.constant 0 : index
    %5 = vector.load %arg2[%c0_2, %c0_3] : memref<128x512xf32, #tpu.memory_space<vmem>>, vector<128x512xf32>
    %cst_4 = arith.constant dense<0.000000e+00> : vector<8x512xf32>
    %6 = tpu.matmul %0, %5, %cst_4 {dimension_numbers = #tpu.dot_dimension_numbers<[1], [0], [0], [1], [0, 0, 1, 1], [], []>} : vector<8x128xf32>, vector<128x512xf32>, vector<8x512xf32> -> vector<8x512xf32>
    %7 = arith.addf %4, %6 : vector<8x512xf32>
    %8 = vector.extract_strided_slice %7 {offsets = [0, 0], sizes = [8, 128], strides = [1, 1]} : vector<8x512xf32> to vector<8x128xf32>
    %9 = arith.negf %8 : vector<8x128xf32>
    %10 = math.exp %9 : vector<8x128xf32>
    %cst_5 = arith.constant 1.000000e+00 : f32
    %11 = vector.broadcast %cst_5 : f32 to vector<8x128xf32>
    %12 = arith.addf %11, %10 : vector<8x128xf32>
    %13 = arith.divf %11, %12 : vector<8x128xf32>
    %14 = vector.extract_strided_slice %7 {offsets = [0, 128], sizes = [8, 128], strides = [1, 1]} : vector<8x512xf32> to vector<8x128xf32>
    %15 = arith.negf %14 : vector<8x128xf32>
    %16 = math.exp %15 : vector<8x128xf32>
    %cst_6 = arith.constant 1.000000e+00 : f32
    %17 = vector.broadcast %cst_6 : f32 to vector<8x128xf32>
    %18 = arith.addf %17, %16 : vector<8x128xf32>
    %19 = arith.divf %17, %18 : vector<8x128xf32>
    %20 = vector.extract_strided_slice %7 {offsets = [0, 256], sizes = [8, 128], strides = [1, 1]} : vector<8x512xf32> to vector<8x128xf32>
    %21 = math.tanh %20 : vector<8x128xf32>
    %22 = vector.extract_strided_slice %7 {offsets = [0, 384], sizes = [8, 128], strides = [1, 1]} : vector<8x512xf32> to vector<8x128xf32>
    %23 = arith.negf %22 : vector<8x128xf32>
    %24 = math.exp %23 : vector<8x128xf32>
    %cst_7 = arith.constant 1.000000e+00 : f32
    %25 = vector.broadcast %cst_7 : f32 to vector<8x128xf32>
    %26 = arith.addf %25, %24 : vector<8x128xf32>
    %27 = arith.divf %25, %26 : vector<8x128xf32>
    %28 = arith.mulf %19, %1 : vector<8x128xf32>
    %29 = arith.mulf %13, %21 : vector<8x128xf32>
    %30 = arith.addf %28, %29 : vector<8x128xf32>
    %31 = math.tanh %30 : vector<8x128xf32>
    %32 = arith.mulf %27, %31 : vector<8x128xf32>
    %c1_i32 = arith.constant 1 : i32
    %33 = arith.index_cast %c1_i32 : i32 to index
    %c0_8 = arith.constant 0 : index
    %c0_9 = arith.constant 0 : index
    %34 = vector.load %arg1[%33, %c0_8, %c0_9] : memref<8x8x512xf32, #tpu.memory_space<vmem>>, vector<1x8x512xf32>
    %35 = vector.shape_cast %34 : vector<1x8x512xf32> to vector<8x512xf32>
    %c0_10 = arith.constant 0 : index
    %c0_11 = arith.constant 0 : index
    %36 = vector.load %arg2[%c0_10, %c0_11] : memref<128x512xf32, #tpu.memory_space<vmem>>, vector<128x512xf32>
    %cst_12 = arith.constant dense<0.000000e+00> : vector<8x512xf32>
    %37 = tpu.matmul %32, %36, %cst_12 {dimension_numbers = #tpu.dot_dimension_numbers<[1], [0], [0], [1], [0, 0, 1, 1], [], []>} : vector<8x128xf32>, vector<128x512xf32>, vector<8x512xf32> -> vector<8x512xf32>
    %38 = arith.addf %35, %37 : vector<8x512xf32>
    %39 = vector.extract_strided_slice %38 {offsets = [0, 0], sizes = [8, 128], strides = [1, 1]} : vector<8x512xf32> to vector<8x128xf32>
    %40 = arith.negf %39 : vector<8x128xf32>
    %41 = math.exp %40 : vector<8x128xf32>
    %cst_13 = arith.constant 1.000000e+00 : f32
    %42 = vector.broadcast %cst_13 : f32 to vector<8x128xf32>
    %43 = arith.addf %42, %41 : vector<8x128xf32>
    %44 = arith.divf %42, %43 : vector<8x128xf32>
    %45 = vector.extract_strided_slice %38 {offsets = [0, 128], sizes = [8, 128], strides = [1, 1]} : vector<8x512xf32> to vector<8x128xf32>
    %46 = arith.negf %45 : vector<8x128xf32>
    %47 = math.exp %46 : vector<8x128xf32>
    %cst_14 = arith.constant 1.000000e+00 : f32
    %48 = vector.broadcast %cst_14 : f32 to vector<8x128xf32>
    %49 = arith.addf %48, %47 : vector<8x128xf32>
    %50 = arith.divf %48, %49 : vector<8x128xf32>
    %51 = vector.extract_strided_slice %38 {offsets = [0, 256], sizes = [8, 128], strides = [1, 1]} : vector<8x512xf32> to vector<8x128xf32>
    %52 = math.tanh %51 : vector<8x128xf32>
    %53 = vector.extract_strided_slice %38 {offsets = [0, 384], sizes = [8, 128], strides = [1, 1]} : vector<8x512xf32> to vector<8x128xf32>
    %54 = arith.negf %53 : vector<8x128xf32>
    %55 = math.exp %54 : vector<8x128xf32>
    %cst_15 = arith.constant 1.000000e+00 : f32
    %56 = vector.broadcast %cst_15 : f32 to vector<8x128xf32>
    %57 = arith.addf %56, %55 : vector<8x128xf32>
    %58 = arith.divf %56, %57 : vector<8x128xf32>
    %59 = arith.mulf %50, %30 : vector<8x128xf32>
    %60 = arith.mulf %44, %52 : vector<8x128xf32>
    %61 = arith.addf %59, %60 : vector<8x128xf32>
    %62 = math.tanh %61 : vector<8x128xf32>
    %63 = arith.mulf %58, %62 : vector<8x128xf32>
    %c2_i32 = arith.constant 2 : i32
    %64 = arith.index_cast %c2_i32 : i32 to index
    %c0_16 = arith.constant 0 : index
    %c0_17 = arith.constant 0 : index
    %65 = vector.load %arg1[%64, %c0_16, %c0_17] : memref<8x8x512xf32, #tpu.memory_space<vmem>>, vector<1x8x512xf32>
    %66 = vector.shape_cast %65 : vector<1x8x512xf32> to vector<8x512xf32>
    %c0_18 = arith.constant 0 : index
    %c0_19 = arith.constant 0 : index
    %67 = vector.load %arg2[%c0_18, %c0_19] : memref<128x512xf32, #tpu.memory_space<vmem>>, vector<128x512xf32>
    %cst_20 = arith.constant dense<0.000000e+00> : vector<8x512xf32>
    %68 = tpu.matmul %63, %67, %cst_20 {dimension_numbers = #tpu.dot_dimension_numbers<[1], [0], [0], [1], [0, 0, 1, 1], [], []>} : vector<8x128xf32>, vector<128x512xf32>, vector<8x512xf32> -> vector<8x512xf32>
    %69 = arith.addf %66, %68 : vector<8x512xf32>
    %70 = vector.extract_strided_slice %69 {offsets = [0, 0], sizes = [8, 128], strides = [1, 1]} : vector<8x512xf32> to vector<8x128xf32>
    %71 = arith.negf %70 : vector<8x128xf32>
    %72 = math.exp %71 : vector<8x128xf32>
    %cst_21 = arith.constant 1.000000e+00 : f32
    %73 = vector.broadcast %cst_21 : f32 to vector<8x128xf32>
    %74 = arith.addf %73, %72 : vector<8x128xf32>
    %75 = arith.divf %73, %74 : vector<8x128xf32>
    %76 = vector.extract_strided_slice %69 {offsets = [0, 128], sizes = [8, 128], strides = [1, 1]} : vector<8x512xf32> to vector<8x128xf32>
    %77 = arith.negf %76 : vector<8x128xf32>
    %78 = math.exp %77 : vector<8x128xf32>
    %cst_22 = arith.constant 1.000000e+00 : f32
    %79 = vector.broadcast %cst_22 : f32 to vector<8x128xf32>
    %80 = arith.addf %79, %78 : vector<8x128xf32>
    %81 = arith.divf %79, %80 : vector<8x128xf32>
    %82 = vector.extract_strided_slice %69 {offsets = [0, 256], sizes = [8, 128], strides = [1, 1]} : vector<8x512xf32> to vector<8x128xf32>
    %83 = math.tanh %82 : vector<8x128xf32>
    %84 = vector.extract_strided_slice %69 {offsets = [0, 384], sizes = [8, 128], strides = [1, 1]} : vector<8x512xf32> to vector<8x128xf32>
    %85 = arith.negf %84 : vector<8x128xf32>
    %86 = math.exp %85 : vector<8x128xf32>
    %cst_23 = arith.constant 1.000000e+00 : f32
    %87 = vector.broadcast %cst_23 : f32 to vector<8x128xf32>
    %88 = arith.addf %87, %86 : vector<8x128xf32>
    %89 = arith.divf %87, %88 : vector<8x128xf32>
    %90 = arith.mulf %81, %61 : vector<8x128xf32>
    %91 = arith.mulf %75, %83 : vector<8x128xf32>
    %92 = arith.addf %90, %91 : vector<8x128xf32>
    %93 = math.tanh %92 : vector<8x128xf32>
    %94 = arith.mulf %89, %93 : vector<8x128xf32>
    %c3_i32 = arith.constant 3 : i32
    %95 = arith.index_cast %c3_i32 : i32 to index
    %c0_24 = arith.constant 0 : index
    %c0_25 = arith.constant 0 : index
    %96 = vector.load %arg1[%95, %c0_24, %c0_25] : memref<8x8x512xf32, #tpu.memory_space<vmem>>, vector<1x8x512xf32>
    %97 = vector.shape_cast %96 : vector<1x8x512xf32> to vector<8x512xf32>
    %c0_26 = arith.constant 0 : index
    %c0_27 = arith.constant 0 : index
    %98 = vector.load %arg2[%c0_26, %c0_27] : memref<128x512xf32, #tpu.memory_space<vmem>>, vector<128x512xf32>
    %cst_28 = arith.constant dense<0.000000e+00> : vector<8x512xf32>
    %99 = tpu.matmul %94, %98, %cst_28 {dimension_numbers = #tpu.dot_dimension_numbers<[1], [0], [0], [1], [0, 0, 1, 1], [], []>} : vector<8x128xf32>, vector<128x512xf32>, vector<8x512xf32> -> vector<8x512xf32>
    %100 = arith.addf %97, %99 : vector<8x512xf32>
    %101 = vector.extract_strided_slice %100 {offsets = [0, 0], sizes = [8, 128], strides = [1, 1]} : vector<8x512xf32> to vector<8x128xf32>
    %102 = arith.negf %101 : vector<8x128xf32>
    %103 = math.exp %102 : vector<8x128xf32>
    %cst_29 = arith.constant 1.000000e+00 : f32
    %104 = vector.broadcast %cst_29 : f32 to vector<8x128xf32>
    %105 = arith.addf %104, %103 : vector<8x128xf32>
    %106 = arith.divf %104, %105 : vector<8x128xf32>
    %107 = vector.extract_strided_slice %100 {offsets = [0, 128], sizes = [8, 128], strides = [1, 1]} : vector<8x512xf32> to vector<8x128xf32>
    %108 = arith.negf %107 : vector<8x128xf32>
    %109 = math.exp %108 : vector<8x128xf32>
    %cst_30 = arith.constant 1.000000e+00 : f32
    %110 = vector.broadcast %cst_30 : f32 to vector<8x128xf32>
    %111 = arith.addf %110, %109 : vector<8x128xf32>
    %112 = arith.divf %110, %111 : vector<8x128xf32>
    %113 = vector.extract_strided_slice %100 {offsets = [0, 256], sizes = [8, 128], strides = [1, 1]} : vector<8x512xf32> to vector<8x128xf32>
    %114 = math.tanh %113 : vector<8x128xf32>
    %115 = vector.extract_strided_slice %100 {offsets = [0, 384], sizes = [8, 128], strides = [1, 1]} : vector<8x512xf32> to vector<8x128xf32>
    %116 = arith.negf %115 : vector<8x128xf32>
    %117 = math.exp %116 : vector<8x128xf32>
    %cst_31 = arith.constant 1.000000e+00 : f32
    %118 = vector.broadcast %cst_31 : f32 to vector<8x128xf32>
    %119 = arith.addf %118, %117 : vector<8x128xf32>
    %120 = arith.divf %118, %119 : vector<8x128xf32>
    %121 = arith.mulf %112, %92 : vector<8x128xf32>
    %122 = arith.mulf %106, %114 : vector<8x128xf32>
    %123 = arith.addf %121, %122 : vector<8x128xf32>
    %124 = math.tanh %123 : vector<8x128xf32>
    %125 = arith.mulf %120, %124 : vector<8x128xf32>
    %c4_i32 = arith.constant 4 : i32
    %126 = arith.index_cast %c4_i32 : i32 to index
    %c0_32 = arith.constant 0 : index
    %c0_33 = arith.constant 0 : index
    %127 = vector.load %arg1[%126, %c0_32, %c0_33] : memref<8x8x512xf32, #tpu.memory_space<vmem>>, vector<1x8x512xf32>
    %128 = vector.shape_cast %127 : vector<1x8x512xf32> to vector<8x512xf32>
    %c0_34 = arith.constant 0 : index
    %c0_35 = arith.constant 0 : index
    %129 = vector.load %arg2[%c0_34, %c0_35] : memref<128x512xf32, #tpu.memory_space<vmem>>, vector<128x512xf32>
    %cst_36 = arith.constant dense<0.000000e+00> : vector<8x512xf32>
    %130 = tpu.matmul %125, %129, %cst_36 {dimension_numbers = #tpu.dot_dimension_numbers<[1], [0], [0], [1], [0, 0, 1, 1], [], []>} : vector<8x128xf32>, vector<128x512xf32>, vector<8x512xf32> -> vector<8x512xf32>
    %131 = arith.addf %128, %130 : vector<8x512xf32>
    %132 = vector.extract_strided_slice %131 {offsets = [0, 0], sizes = [8, 128], strides = [1, 1]} : vector<8x512xf32> to vector<8x128xf32>
    %133 = arith.negf %132 : vector<8x128xf32>
    %134 = math.exp %133 : vector<8x128xf32>
    %cst_37 = arith.constant 1.000000e+00 : f32
    %135 = vector.broadcast %cst_37 : f32 to vector<8x128xf32>
    %136 = arith.addf %135, %134 : vector<8x128xf32>
    %137 = arith.divf %135, %136 : vector<8x128xf32>
    %138 = vector.extract_strided_slice %131 {offsets = [0, 128], sizes = [8, 128], strides = [1, 1]} : vector<8x512xf32> to vector<8x128xf32>
    %139 = arith.negf %138 : vector<8x128xf32>
    %140 = math.exp %139 : vector<8x128xf32>
    %cst_38 = arith.constant 1.000000e+00 : f32
    %141 = vector.broadcast %cst_38 : f32 to vector<8x128xf32>
    %142 = arith.addf %141, %140 : vector<8x128xf32>
    %143 = arith.divf %141, %142 : vector<8x128xf32>
    %144 = vector.extract_strided_slice %131 {offsets = [0, 256], sizes = [8, 128], strides = [1, 1]} : vector<8x512xf32> to vector<8x128xf32>
    %145 = math.tanh %144 : vector<8x128xf32>
    %146 = vector.extract_strided_slice %131 {offsets = [0, 384], sizes = [8, 128], strides = [1, 1]} : vector<8x512xf32> to vector<8x128xf32>
    %147 = arith.negf %146 : vector<8x128xf32>
    %148 = math.exp %147 : vector<8x128xf32>
    %cst_39 = arith.constant 1.000000e+00 : f32
    %149 = vector.broadcast %cst_39 : f32 to vector<8x128xf32>
    %150 = arith.addf %149, %148 : vector<8x128xf32>
    %151 = arith.divf %149, %150 : vector<8x128xf32>
    %152 = arith.mulf %143, %123 : vector<8x128xf32>
    %153 = arith.mulf %137, %145 : vector<8x128xf32>
    %154 = arith.addf %152, %153 : vector<8x128xf32>
    %155 = math.tanh %154 : vector<8x128xf32>
    %156 = arith.mulf %151, %155 : vector<8x128xf32>
    %c5_i32 = arith.constant 5 : i32
    %157 = arith.index_cast %c5_i32 : i32 to index
    %c0_40 = arith.constant 0 : index
    %c0_41 = arith.constant 0 : index
    %158 = vector.load %arg1[%157, %c0_40, %c0_41] : memref<8x8x512xf32, #tpu.memory_space<vmem>>, vector<1x8x512xf32>
    %159 = vector.shape_cast %158 : vector<1x8x512xf32> to vector<8x512xf32>
    %c0_42 = arith.constant 0 : index
    %c0_43 = arith.constant 0 : index
    %160 = vector.load %arg2[%c0_42, %c0_43] : memref<128x512xf32, #tpu.memory_space<vmem>>, vector<128x512xf32>
    %cst_44 = arith.constant dense<0.000000e+00> : vector<8x512xf32>
    %161 = tpu.matmul %156, %160, %cst_44 {dimension_numbers = #tpu.dot_dimension_numbers<[1], [0], [0], [1], [0, 0, 1, 1], [], []>} : vector<8x128xf32>, vector<128x512xf32>, vector<8x512xf32> -> vector<8x512xf32>
    %162 = arith.addf %159, %161 : vector<8x512xf32>
    %163 = vector.extract_strided_slice %162 {offsets = [0, 0], sizes = [8, 128], strides = [1, 1]} : vector<8x512xf32> to vector<8x128xf32>
    %164 = arith.negf %163 : vector<8x128xf32>
    %165 = math.exp %164 : vector<8x128xf32>
    %cst_45 = arith.constant 1.000000e+00 : f32
    %166 = vector.broadcast %cst_45 : f32 to vector<8x128xf32>
    %167 = arith.addf %166, %165 : vector<8x128xf32>
    %168 = arith.divf %166, %167 : vector<8x128xf32>
    %169 = vector.extract_strided_slice %162 {offsets = [0, 128], sizes = [8, 128], strides = [1, 1]} : vector<8x512xf32> to vector<8x128xf32>
    %170 = arith.negf %169 : vector<8x128xf32>
    %171 = math.exp %170 : vector<8x128xf32>
    %cst_46 = arith.constant 1.000000e+00 : f32
    %172 = vector.broadcast %cst_46 : f32 to vector<8x128xf32>
    %173 = arith.addf %172, %171 : vector<8x128xf32>
    %174 = arith.divf %172, %173 : vector<8x128xf32>
    %175 = vector.extract_strided_slice %162 {offsets = [0, 256], sizes = [8, 128], strides = [1, 1]} : vector<8x512xf32> to vector<8x128xf32>
    %176 = math.tanh %175 : vector<8x128xf32>
    %177 = vector.extract_strided_slice %162 {offsets = [0, 384], sizes = [8, 128], strides = [1, 1]} : vector<8x512xf32> to vector<8x128xf32>
    %178 = arith.negf %177 : vector<8x128xf32>
    %179 = math.exp %178 : vector<8x128xf32>
    %cst_47 = arith.constant 1.000000e+00 : f32
    %180 = vector.broadcast %cst_47 : f32 to vector<8x128xf32>
    %181 = arith.addf %180, %179 : vector<8x128xf32>
    %182 = arith.divf %180, %181 : vector<8x128xf32>
    %183 = arith.mulf %174, %154 : vector<8x128xf32>
    %184 = arith.mulf %168, %176 : vector<8x128xf32>
    %185 = arith.addf %183, %184 : vector<8x128xf32>
    %186 = math.tanh %185 : vector<8x128xf32>
    %187 = arith.mulf %182, %186 : vector<8x128xf32>
    %c6_i32 = arith.constant 6 : i32
    %188 = arith.index_cast %c6_i32 : i32 to index
    %c0_48 = arith.constant 0 : index
    %c0_49 = arith.constant 0 : index
    %189 = vector.load %arg1[%188, %c0_48, %c0_49] : memref<8x8x512xf32, #tpu.memory_space<vmem>>, vector<1x8x512xf32>
    %190 = vector.shape_cast %189 : vector<1x8x512xf32> to vector<8x512xf32>
    %c0_50 = arith.constant 0 : index
    %c0_51 = arith.constant 0 : index
    %191 = vector.load %arg2[%c0_50, %c0_51] : memref<128x512xf32, #tpu.memory_space<vmem>>, vector<128x512xf32>
    %cst_52 = arith.constant dense<0.000000e+00> : vector<8x512xf32>
    %192 = tpu.matmul %187, %191, %cst_52 {dimension_numbers = #tpu.dot_dimension_numbers<[1], [0], [0], [1], [0, 0, 1, 1], [], []>} : vector<8x128xf32>, vector<128x512xf32>, vector<8x512xf32> -> vector<8x512xf32>
    %193 = arith.addf %190, %192 : vector<8x512xf32>
    %194 = vector.extract_strided_slice %193 {offsets = [0, 0], sizes = [8, 128], strides = [1, 1]} : vector<8x512xf32> to vector<8x128xf32>
    %195 = arith.negf %194 : vector<8x128xf32>
    %196 = math.exp %195 : vector<8x128xf32>
    %cst_53 = arith.constant 1.000000e+00 : f32
    %197 = vector.broadcast %cst_53 : f32 to vector<8x128xf32>
    %198 = arith.addf %197, %196 : vector<8x128xf32>
    %199 = arith.divf %197, %198 : vector<8x128xf32>
    %200 = vector.extract_strided_slice %193 {offsets = [0, 128], sizes = [8, 128], strides = [1, 1]} : vector<8x512xf32> to vector<8x128xf32>
    %201 = arith.negf %200 : vector<8x128xf32>
    %202 = math.exp %201 : vector<8x128xf32>
    %cst_54 = arith.constant 1.000000e+00 : f32
    %203 = vector.broadcast %cst_54 : f32 to vector<8x128xf32>
    %204 = arith.addf %203, %202 : vector<8x128xf32>
    %205 = arith.divf %203, %204 : vector<8x128xf32>
    %206 = vector.extract_strided_slice %193 {offsets = [0, 256], sizes = [8, 128], strides = [1, 1]} : vector<8x512xf32> to vector<8x128xf32>
    %207 = math.tanh %206 : vector<8x128xf32>
    %208 = vector.extract_strided_slice %193 {offsets = [0, 384], sizes = [8, 128], strides = [1, 1]} : vector<8x512xf32> to vector<8x128xf32>
    %209 = arith.negf %208 : vector<8x128xf32>
    %210 = math.exp %209 : vector<8x128xf32>
    %cst_55 = arith.constant 1.000000e+00 : f32
    %211 = vector.broadcast %cst_55 : f32 to vector<8x128xf32>
    %212 = arith.addf %211, %210 : vector<8x128xf32>
    %213 = arith.divf %211, %212 : vector<8x128xf32>
    %214 = arith.mulf %205, %185 : vector<8x128xf32>
    %215 = arith.mulf %199, %207 : vector<8x128xf32>
    %216 = arith.addf %214, %215 : vector<8x128xf32>
    %217 = math.tanh %216 : vector<8x128xf32>
    %218 = arith.mulf %213, %217 : vector<8x128xf32>
    %c7_i32 = arith.constant 7 : i32
    %219 = arith.index_cast %c7_i32 : i32 to index
    %c0_56 = arith.constant 0 : index
    %c0_57 = arith.constant 0 : index
    %220 = vector.load %arg1[%219, %c0_56, %c0_57] : memref<8x8x512xf32, #tpu.memory_space<vmem>>, vector<1x8x512xf32>
    %221 = vector.shape_cast %220 : vector<1x8x512xf32> to vector<8x512xf32>
    %c0_58 = arith.constant 0 : index
    %c0_59 = arith.constant 0 : index
    %222 = vector.load %arg2[%c0_58, %c0_59] : memref<128x512xf32, #tpu.memory_space<vmem>>, vector<128x512xf32>
    %cst_60 = arith.constant dense<0.000000e+00> : vector<8x512xf32>
    %223 = tpu.matmul %218, %222, %cst_60 {dimension_numbers = #tpu.dot_dimension_numbers<[1], [0], [0], [1], [0, 0, 1, 1], [], []>} : vector<8x128xf32>, vector<128x512xf32>, vector<8x512xf32> -> vector<8x512xf32>
    %224 = arith.addf %221, %223 : vector<8x512xf32>
    %225 = vector.extract_strided_slice %224 {offsets = [0, 0], sizes = [8, 128], strides = [1, 1]} : vector<8x512xf32> to vector<8x128xf32>
    %226 = arith.negf %225 : vector<8x128xf32>
    %227 = math.exp %226 : vector<8x128xf32>
    %cst_61 = arith.constant 1.000000e+00 : f32
    %228 = vector.broadcast %cst_61 : f32 to vector<8x128xf32>
    %229 = arith.addf %228, %227 : vector<8x128xf32>
    %230 = arith.divf %228, %229 : vector<8x128xf32>
    %231 = vector.extract_strided_slice %224 {offsets = [0, 128], sizes = [8, 128], strides = [1, 1]} : vector<8x512xf32> to vector<8x128xf32>
    %232 = arith.negf %231 : vector<8x128xf32>
    %233 = math.exp %232 : vector<8x128xf32>
    %cst_62 = arith.constant 1.000000e+00 : f32
    %234 = vector.broadcast %cst_62 : f32 to vector<8x128xf32>
    %235 = arith.addf %234, %233 : vector<8x128xf32>
    %236 = arith.divf %234, %235 : vector<8x128xf32>
    %237 = vector.extract_strided_slice %224 {offsets = [0, 256], sizes = [8, 128], strides = [1, 1]} : vector<8x512xf32> to vector<8x128xf32>
    %238 = math.tanh %237 : vector<8x128xf32>
    %239 = vector.extract_strided_slice %224 {offsets = [0, 384], sizes = [8, 128], strides = [1, 1]} : vector<8x512xf32> to vector<8x128xf32>
    %240 = arith.negf %239 : vector<8x128xf32>
    %241 = math.exp %240 : vector<8x128xf32>
    %cst_63 = arith.constant 1.000000e+00 : f32
    %242 = vector.broadcast %cst_63 : f32 to vector<8x128xf32>
    %243 = arith.addf %242, %241 : vector<8x128xf32>
    %244 = arith.divf %242, %243 : vector<8x128xf32>
    %245 = arith.mulf %236, %216 : vector<8x128xf32>
    %246 = arith.mulf %230, %238 : vector<8x128xf32>
    %247 = arith.addf %245, %246 : vector<8x128xf32>
    %248 = math.tanh %247 : vector<8x128xf32>
    %249 = arith.mulf %244, %248 : vector<8x128xf32>
    %c8_i32 = arith.constant 8 : i32
    %c0_64 = arith.constant 0 : index
    %c0_65 = arith.constant 0 : index
    %250 = vector.load %arg3[%c0_64, %c0_65] : memref<128x128xf32, #tpu.memory_space<vmem>>, vector<128x128xf32>
    %cst_66 = arith.constant dense<0.000000e+00> : vector<8x128xf32>
    %251 = tpu.matmul %249, %250, %cst_66 {dimension_numbers = #tpu.dot_dimension_numbers<[1], [0], [0], [1], [0, 0, 1, 1], [], []>} : vector<8x128xf32>, vector<128x128xf32>, vector<8x128xf32> -> vector<8x128xf32>
    %c0_67 = arith.constant 0 : index
    %c0_68 = arith.constant 0 : index
    %252 = vector.load %arg4[%c0_67, %c0_68] : memref<1x128xf32, #tpu.memory_space<vmem>>, vector<1x128xf32>
    %253 = vector.broadcast %252 : vector<1x128xf32> to vector<8x128xf32>
    %254 = arith.addf %251, %253 : vector<8x128xf32>
    %cst_69 = arith.constant dense<0xFF800000> : vector<8xf32>
    %255 = vector.multi_reduction <maximumf>, %254, %cst_69 [1] : vector<8x128xf32> to vector<8xf32>
    %256 = vector.shape_cast %255 : vector<8xf32> to vector<8x1xf32>
    %257 = vector.broadcast %256 : vector<8x1xf32> to vector<8x128xf32>
    %258 = arith.subf %254, %257 : vector<8x128xf32>
    %259 = math.exp %258 : vector<8x128xf32>
    %cst_70 = arith.constant dense<0.000000e+00> : vector<8xf32>
    %260 = vector.multi_reduction <add>, %259, %cst_70 [1] : vector<8x128xf32> to vector<8xf32>
    %261 = vector.shape_cast %260 : vector<8xf32> to vector<8x1xf32>
    %262 = tpu.reciprocal %261 {approx = true} : vector<8x1xf32> -> vector<8x1xf32>
    %263 = vector.broadcast %262 : vector<8x1xf32> to vector<8x128xf32>
    %264 = arith.mulf %259, %263 : vector<8x128xf32>
    %c0_71 = arith.constant 0 : index
    %c0_72 = arith.constant 0 : index
    %265 = vector.load %arg5[%c0_71, %c0_72] : memref<8x128xf32, #tpu.memory_space<vmem>>, vector<8x128xf32>
    tpu.vector_store %arg5[%c0_71, %c0_72], %264 {strides = array<i32>} : memref<8x128xf32, #tpu.memory_space<vmem>>, vector<8x128xf32>,
    return
  }
  func.func @transform_0(%arg0: i32) -> (i32, i32, i32) {
    %c0_i32 = arith.constant 0 : i32
    %c0_i32_0 = arith.constant 0 : i32
    %c0_i32_1 = arith.constant 0 : i32
    return %c0_i32, %arg0, %c0_i32_0 : i32, i32, i32
  }
  func.func @transform_1(%arg0: i32) -> (i32, i32) {
    %c0_i32 = arith.constant 0 : i32
    %c0_i32_0 = arith.constant 0 : i32
    %c0_i32_1 = arith.constant 0 : i32
    return %c0_i32, %c0_i32_0 : i32, i32
  }
  func.func @transform_2(%arg0: i32) -> (i32, i32) {
    %c0_i32 = arith.constant 0 : i32
    %c0_i32_0 = arith.constant 0 : i32
    %c0_i32_1 = arith.constant 0 : i32
    return %c0_i32, %c0_i32_0 : i32, i32
  }
  func.func @transform_3(%arg0: i32) -> (i32, i32) {
    %c0_i32 = arith.constant 0 : i32
    %c0_i32_0 = arith.constant 0 : i32
    %c0_i32_1 = arith.constant 0 : i32
    return %c0_i32, %c0_i32_0 : i32, i32
  }
  func.func @transform_4(%arg0: i32) -> (i32, i32) {
    %c0_i32 = arith.constant 0 : i32
    %c0_i32_0 = arith.constant 0 : i32
    return %arg0, %c0_i32 : i32, i32
  }
}

</mosaic_0001>

<llo_original>
// kernel: lstm_forward.1
$region0: #{lstm_forward.1}
  #allocation0 [shape = 'u32[]', space=smem, size = 0x4, offset = 0x4, fixed_abs, tag = 'smem constant byte address 0x4 - core index']
  #allocation1 [shape = 'u32[72,128]{1,0:T(1,128)}', space=vmem, size = 0x9000, scoped, tag = 'internal scratch']
  %s0 = inlined_call_operand.vmem [shape: f32[8,8,512], index: 0, kind: input, shape index: {}]
  %s1 = inlined_call_operand.vmem [shape: f32[128,512], index: 1, kind: input, shape index: {}]
  %s2 = inlined_call_operand.vmem [shape: f32[128,128], index: 2, kind: input, shape index: {}]
  %s3 = inlined_call_operand.vmem [shape: f32[1,128], index: 3, kind: input, shape index: {}]
  %s4 = inlined_call_operand.vmem [shape: f32[8,128], index: 4, kind: output, shape index: {}]
  %s5 = sld [smem:[#allocation0]]
  $region26: #{lstm_forward.1} parent=0
    _
  %s7 = ssub.s32 1, %s5
  %s8 = scalar_select 0, %s7, %s5
  // Predicated region
  $region2: #{lstm_forward.1} parent=0 // pred_check
    _
  $region3: #{lstm_forward.1} parent=0 // pred_check_branch
    %10 = sbr.rel (0) target = $region5
  $region4: #{lstm_forward.1} parent=0 // pred_region
    _
  $region5: #{lstm_forward.1} parent=0 // pred_fallthru
    _
  // Predicated region
  $region6: #{lstm_forward.1} parent=0 // pred_check
    _
  $region7: #{lstm_forward.1} parent=0 // pred_check_branch
    %12 = sbr.rel (0) target = $region9
  $region8: #{lstm_forward.1} parent=0 // pred_region
    _
  $region9: #{lstm_forward.1} parent=0 // pred_fallthru
    _
  // Predicated region
  $region10: #{lstm_forward.1} parent=0 // pred_check
    _
  $region11: #{lstm_forward.1} parent=0 // pred_check_branch
    %14 = sbr.rel (0) target = $region13
  $region12: #{lstm_forward.1} parent=0 // pred_region
    _
  $region13: #{lstm_forward.1} parent=0 // pred_fallthru
    _
  // Predicated region
  $region14: #{lstm_forward.1} parent=0 // pred_check
    _
  $region15: #{lstm_forward.1} parent=0 // pred_check_branch
    %16 = sbr.rel (0) target = $region17
  $region16: #{lstm_forward.1} parent=0 // pred_region
    _
  $region17: #{lstm_forward.1} parent=0 // pred_fallthru
    _
  %v17 = vld [vmem:[%s0] sm:$0xff]
  %v18 = vld [vmem:[%s0 + $0x8] sm:$0xff]
  %v19 = vld [vmem:[%s0 + $0x10] sm:$0xff]
  %v20 = vld [vmem:[%s0 + $0x18] sm:$0xff]
  %v21 = vld [vmem:[%s1] sm:$0xff]
  %v22 = vld [vmem:[%s1 + $0x8] sm:$0xff]
  %v23 = vld [vmem:[%s1 + $0x10] sm:$0xff]
  %v24 = vld [vmem:[%s1 + $0x18] sm:$0xff]
  %v25 = vld [vmem:[%s1 + $0x20] sm:$0xff]
  %v26 = vld [vmem:[%s1 + $0x28] sm:$0xff]
  %v27 = vld [vmem:[%s1 + $0x30] sm:$0xff]
  %v28 = vld [vmem:[%s1 + $0x38] sm:$0xff]
  %v29 = vld [vmem:[%s1 + $0x40] sm:$0xff]
  %v30 = vld [vmem:[%s1 + $0x48] sm:$0xff]
  %v31 = vld [vmem:[%s1 + $0x50] sm:$0xff]
  %v32 = vld [vmem:[%s1 + $0x58] sm:$0xff]
  %v33 = vld [vmem:[%s1 + $0x60] sm:$0xff]
  %v34 = vld [vmem:[%s1 + $0x68] sm:$0xff]
  %v35 = vld [vmem:[%s1 + $0x70] sm:$0xff]
  %v36 = vld [vmem:[%s1 + $0x78] sm:$0xff]
  %v37 = vld [vmem:[%s1 + $0x80] sm:$0xff]
  %v38 = vld [vmem:[%s1 + $0x88] sm:$0xff]
  %v39 = vld [vmem:[%s1 + $0x90] sm:$0xff]
  %v40 = vld [vmem:[%s1 + $0x98] sm:$0xff]
  %v41 = vld [vmem:[%s1 + $0xa0] sm:$0xff]
  %v42 = vld [vmem:[%s1 + $0xa8] sm:$0xff]
  %v43 = vld [vmem:[%s1 + $0xb0] sm:$0xff]
  %v44 = vld [vmem:[%s1 + $0xb8] sm:$0xff]
  %v45 = vld [vmem:[%s1 + $0xc0] sm:$0xff]
  %v46 = vld [vmem:[%s1 + $0xc8] sm:$0xff]
  %v47 = vld [vmem:[%s1 + $0xd0] sm:$0xff]
  %v48 = vld [vmem:[%s1 + $0xd8] sm:$0xff]
  %v49 = vld [vmem:[%s1 + $0xe0] sm:$0xff]
  %v50 = vld [vmem:[%s1 + $0xe8] sm:$0xff]
  %v51 = vld [vmem:[%s1 + $0xf0] sm:$0xff]
  %v52 = vld [vmem:[%s1 + $0xf8] sm:$0xff]
  %v53 = vld [vmem:[%s1 + $0x100] sm:$0xff]
  %v54 = vld [vmem:[%s1 + $0x108] sm:$0xff]
  %v55 = vld [vmem:[%s1 + $0x110] sm:$0xff]
  %v56 = vld [vmem:[%s1 + $0x118] sm:$0xff]
  %v57 = vld [vmem:[%s1 + $0x120] sm:$0xff]
  %v58 = vld [vmem:[%s1 + $0x128] sm:$0xff]
  %v59 = vld [vmem:[%s1 + $0x130] sm:$0xff]
  %v60 = vld [vmem:[%s1 + $0x138] sm:$0xff]
  %v61 = vld [vmem:[%s1 + $0x140] sm:$0xff]
  %v62 = vld [vmem:[%s1 + $0x148] sm:$0xff]
  %v63 = vld [vmem:[%s1 + $0x150] sm:$0xff]
  %v64 = vld [vmem:[%s1 + $0x158] sm:$0xff]
  %v65 = vld [vmem:[%s1 + $0x160] sm:$0xff]
  %v66 = vld [vmem:[%s1 + $0x168] sm:$0xff]
  %v67 = vld [vmem:[%s1 + $0x170] sm:$0xff]
  %v68 = vld [vmem:[%s1 + $0x178] sm:$0xff]
  %v69 = vld [vmem:[%s1 + $0x180] sm:$0xff]
  %v70 = vld [vmem:[%s1 + $0x188] sm:$0xff]
  %v71 = vld [vmem:[%s1 + $0x190] sm:$0xff]
  %v72 = vld [vmem:[%s1 + $0x198] sm:$0xff]
  %v73 = vld [vmem:[%s1 + $0x1a0] sm:$0xff]
  %v74 = vld [vmem:[%s1 + $0x1a8] sm:$0xff]
  %v75 = vld [vmem:[%s1 + $0x1b0] sm:$0xff]
  %v76 = vld [vmem:[%s1 + $0x1b8] sm:$0xff]
  %v77 = vld [vmem:[%s1 + $0x1c0] sm:$0xff]
  %v78 = vld [vmem:[%s1 + $0x1c8] sm:$0xff]
  %v79 = vld [vmem:[%s1 + $0x1d0] sm:$0xff]
  %v80 = vld [vmem:[%s1 + $0x1d8] sm:$0xff]
  %v81 = vld [vmem:[%s1 + $0x1e0] sm:$0xff]
  %v82 = vld [vmem:[%s1 + $0x1e8] sm:$0xff]
  %v83 = vld [vmem:[%s1 + $0x1f0] sm:$0xff]
  %v84 = vld [vmem:[%s1 + $0x1f8] sm:$0xff]
  %85 = vmatpush.msra.mxu0 %v81
  %86 = vmatpush.msra.mxu0 %v77
  %87 = vmatpush.msra.mxu0 %v73
  %88 = vmatpush.msra.mxu0 %v69
  %89 = vmatpush.msra.mxu0 %v65
  %90 = vmatpush.msra.mxu0 %v61
  %91 = vmatpush.msra.mxu0 %v57
  %92 = vmatpush.msra.mxu0 %v53
  %93 = vmatpush.msra.mxu0 %v49
  %94 = vmatpush.msra.mxu0 %v45
  %95 = vmatpush.msra.mxu0 %v41
  %96 = vmatpush.msra.mxu0 %v37
  %97 = vmatpush.msra.mxu0 %v33
  %98 = vmatpush.msra.mxu0 %v29
  %99 = vmatpush.msra.mxu0 %v25
  %100 = vmatpush.msra.mxu0 %v21
  %101 = vmatmul.f32.gmra.mxu0 0.0
  %v102 = vpop.f32.mrf.mxu0
  %v103 = vadd.f32 0.0, %v102
  %104 = vdwg.mxu0
  %105 = vmatpush.msra.mxu0 %v82
  %106 = vmatpush.msra.mxu0 %v78
  %107 = vmatpush.msra.mxu0 %v74
  %108 = vmatpush.msra.mxu0 %v70
  %109 = vmatpush.msra.mxu0 %v66
  %110 = vmatpush.msra.mxu0 %v62
  %111 = vmatpush.msra.mxu0 %v58
  %112 = vmatpush.msra.mxu0 %v54
  %113 = vmatpush.msra.mxu0 %v50
  %114 = vmatpush.msra.mxu0 %v46
  %115 = vmatpush.msra.mxu0 %v42
  %116 = vmatpush.msra.mxu0 %v38
  %117 = vmatpush.msra.mxu0 %v34
  %118 = vmatpush.msra.mxu0 %v30
  %119 = vmatpush.msra.mxu0 %v26
  %120 = vmatpush.msra.mxu0 %v22
  %121 = vmatmul.f32.gmra.mxu0 0.0
  %v122 = vpop.f32.mrf.mxu0
  %v123 = vadd.f32 0.0, %v122
  %124 = vdwg.mxu0
  %125 = vmatpush.msra.mxu0 %v83
  %126 = vmatpush.msra.mxu0 %v79
  %127 = vmatpush.msra.mxu0 %v75
  %128 = vmatpush.msra.mxu0 %v71
  %129 = vmatpush.msra.mxu0 %v67
  %130 = vmatpush.msra.mxu0 %v63
  %131 = vmatpush.msra.mxu0 %v59
  %132 = vmatpush.msra.mxu0 %v55
  %133 = vmatpush.msra.mxu0 %v51
  %134 = vmatpush.msra.mxu0 %v47
  %135 = vmatpush.msra.mxu0 %v43
  %136 = vmatpush.msra.mxu0 %v39
  %137 = vmatpush.msra.mxu0 %v35
  %138 = vmatpush.msra.mxu0 %v31
  %139 = vmatpush.msra.mxu0 %v27
  %140 = vmatpush.msra.mxu0 %v23
  %141 = vmatmul.f32.gmra.mxu0 0.0
  %v142 = vpop.f32.mrf.mxu0
  %v143 = vadd.f32 0.0, %v142
  %144 = vdwg.mxu0
  %145 = vmatpush.msra.mxu0 %v84
  %146 = vmatpush.msra.mxu0 %v80
  %147 = vmatpush.msra.mxu0 %v76
  %148 = vmatpush.msra.mxu0 %v72
  %149 = vmatpush.msra.mxu0 %v68
  %150 = vmatpush.msra.mxu0 %v64
  %151 = vmatpush.msra.mxu0 %v60
  %152 = vmatpush.msra.mxu0 %v56
  %153 = vmatpush.msra.mxu0 %v52
  %154 = vmatpush.msra.mxu0 %v48
  %155 = vmatpush.msra.mxu0 %v44
  %156 = vmatpush.msra.mxu0 %v40
  %157 = vmatpush.msra.mxu0 %v36
  %158 = vmatpush.msra.mxu0 %v32
  %159 = vmatpush.msra.mxu0 %v28
  %160 = vmatpush.msra.mxu0 %v24
  %161 = vmatmul.f32.gmra.mxu0 0.0
  %v162 = vpop.f32.mrf.mxu0
  %v163 = vadd.f32 0.0, %v162
  %164 = vdwg.mxu0
  %v165 = vadd.f32 %v17, %v103
  %v166 = vadd.f32 %v18, %v123
  %v167 = vadd.f32 %v19, %v143
  %v168 = vadd.f32 %v20, %v163
  %v169 = vxor.u32 %v165, 2147483648
  %v170 = vmul.f32 %v169, 1.442695
  %v171 = vpow.pop %v170
  %v172 = vadd.f32 %v171, 1.0
  %v173 = vrcp.pop %v172
  %v174 = vmul.f32 %v172, %v173
  %v175 = vsub.f32 1.0, %v174
  %v176 = vmul.f32 %v173, %v175
  %v177 = vadd.f32 %v173, %v176
  %vm178 = vweird.f32 %v172
  %vm179 = vweird.f32 %v173
  %vm180 = vmor %vm178, %vm179
  %v181 = vsel %vm180, %v173, %v177
  %v182 = vand.u32 2147483647, %v172
  %vm183 = vcmp.eq.f32.partialorder %v182, 8.507059e+37
  %v184 = vand.u32 %v172, 2147483648
  %v185 = vor.u32 1.1754944e-38, %v184
  %v186 = vsel %vm183, %v185, %v181
  %v187 = vmul.f32 1.0, %v186
  %v188 = vxor.u32 %v166, 2147483648
  %v189 = vmul.f32 %v188, 1.442695
  %v190 = vpow.pop %v189
  %v191 = vadd.f32 %v190, 1.0
  %v192 = vrcp.pop %v191
  %v193 = vmul.f32 %v191, %v192
  %v194 = vsub.f32 1.0, %v193
  %v195 = vmul.f32 %v192, %v194
  %v196 = vadd.f32 %v192, %v195
  %vm197 = vweird.f32 %v191
  %vm198 = vweird.f32 %v192
  %vm199 = vmor %vm197, %vm198
  %v200 = vsel %vm199, %v192, %v196
  %v201 = vand.u32 2147483647, %v191
  %vm202 = vcmp.eq.f32.partialorder %v201, 8.507059e+37
  %v203 = vand.u32 %v191, 2147483648
  %v204 = vor.u32 1.1754944e-38, %v203
  %v205 = vsel %vm202, %v204, %v200
  %v206 = vmul.f32 1.0, %v205
  %v207 = vtanh.pop %v167
  %v208 = vxor.u32 %v168, 2147483648
  %v209 = vmul.f32 %v208, 1.442695
  %v210 = vpow.pop %v209
  %v211 = vadd.f32 %v210, 1.0
  %v212 = vrcp.pop %v211
  %v213 = vmul.f32 %v211, %v212
  %v214 = vsub.f32 1.0, %v213
  %v215 = vmul.f32 %v212, %v214
  %v216 = vadd.f32 %v212, %v215
  %vm217 = vweird.f32 %v211
  %vm218 = vweird.f32 %v212
  %vm219 = vmor %vm217, %vm218
  %v220 = vsel %vm219, %v212, %v216
  %v221 = vand.u32 2147483647, %v211
  %vm222 = vcmp.eq.f32.partialorder %v221, 8.507059e+37
  %v223 = vand.u32 %v211, 2147483648
  %v224 = vor.u32 1.1754944e-38, %v223
  %v225 = vsel %vm222, %v224, %v220
  %v226 = vmul.f32 1.0, %v225
  %v227 = vmul.f32 %v206, 0.0
  %v228 = vmul.f32 %v187, %v207
  %v229 = vadd.f32 %v227, %v228
  %v230 = vtanh.pop %v229
  %v231 = vmul.f32 %v226, %v230
  %s232 = scalar_lea.vmem %s0, 32
  %v233 = vld [vmem:[%s232] sm:$0xff]
  %v234 = vld [vmem:[%s232 + $0x8] sm:$0xff]
  %v235 = vld [vmem:[%s232 + $0x10] sm:$0xff]
  %v236 = vld [vmem:[%s232 + $0x18] sm:$0xff]
  %237 = vmatpush.msra.mxu0 %v81
  %238 = vmatpush.msra.mxu0 %v77
  %239 = vmatpush.msra.mxu0 %v73
  %240 = vmatpush.msra.mxu0 %v69
  %241 = vmatpush.msra.mxu0 %v65
  %242 = vmatpush.msra.mxu0 %v61
  %243 = vmatpush.msra.mxu0 %v57
  %244 = vmatpush.msra.mxu0 %v53
  %245 = vmatpush.msra.mxu0 %v49
  %246 = vmatpush.msra.mxu0 %v45
  %247 = vmatpush.msra.mxu0 %v41
  %248 = vmatpush.msra.mxu0 %v37
  %249 = vmatpush.msra.mxu0 %v33
  %250 = vmatpush.msra.mxu0 %v29
  %251 = vmatpush.msra.mxu0 %v25
  %252 = vmatpush.msra.mxu0 %v21
  %253 = vmatmul.f32.gmra.mxu0 %v231
  %v254 = vpop.f32.mrf.mxu0
  %v255 = vadd.f32 0.0, %v254
  %256 = vdwg.mxu0
  %257 = vmatpush.msra.mxu0 %v82
  %258 = vmatpush.msra.mxu0 %v78
  %259 = vmatpush.msra.mxu0 %v74
  %260 = vmatpush.msra.mxu0 %v70
  %261 = vmatpush.msra.mxu0 %v66
  %262 = vmatpush.msra.mxu0 %v62
  %263 = vmatpush.msra.mxu0 %v58
  %264 = vmatpush.msra.mxu0 %v54
  %265 = vmatpush.msra.mxu0 %v50
  %266 = vmatpush.msra.mxu0 %v46
  %267 = vmatpush.msra.mxu0 %v42
  %268 = vmatpush.msra.mxu0 %v38
  %269 = vmatpush.msra.mxu0 %v34
  %270 = vmatpush.msra.mxu0 %v30
  %271 = vmatpush.msra.mxu0 %v26
  %272 = vmatpush.msra.mxu0 %v22
  %273 = vmatmul.f32.gmra.mxu0 %v231
  %v274 = vpop.f32.mrf.mxu0
  %v275 = vadd.f32 0.0, %v274
  %276 = vdwg.mxu0
  %277 = vmatpush.msra.mxu0 %v83
  %278 = vmatpush.msra.mxu0 %v79
  %279 = vmatpush.msra.mxu0 %v75
  %280 = vmatpush.msra.mxu0 %v71
  %281 = vmatpush.msra.mxu0 %v67
  %282 = vmatpush.msra.mxu0 %v63
  %283 = vmatpush.msra.mxu0 %v59
  %284 = vmatpush.msra.mxu0 %v55
  %285 = vmatpush.msra.mxu0 %v51
  %286 = vmatpush.msra.mxu0 %v47
  %287 = vmatpush.msra.mxu0 %v43
  %288 = vmatpush.msra.mxu0 %v39
  %289 = vmatpush.msra.mxu0 %v35
  %290 = vmatpush.msra.mxu0 %v31
  %291 = vmatpush.msra.mxu0 %v27
  %292 = vmatpush.msra.mxu0 %v23
  %293 = vmatmul.f32.gmra.mxu0 %v231
  %v294 = vpop.f32.mrf.mxu0
  %v295 = vadd.f32 0.0, %v294
  %296 = vdwg.mxu0
  %297 = vmatpush.msra.mxu0 %v84
  %298 = vmatpush.msra.mxu0 %v80
  %299 = vmatpush.msra.mxu0 %v76
  %300 = vmatpush.msra.mxu0 %v72
  %301 = vmatpush.msra.mxu0 %v68
  %302 = vmatpush.msra.mxu0 %v64
  %303 = vmatpush.msra.mxu0 %v60
  %304 = vmatpush.msra.mxu0 %v56
  %305 = vmatpush.msra.mxu0 %v52
  %306 = vmatpush.msra.mxu0 %v48
  %307 = vmatpush.msra.mxu0 %v44
  %308 = vmatpush.msra.mxu0 %v40
  %309 = vmatpush.msra.mxu0 %v36
  %310 = vmatpush.msra.mxu0 %v32
  %311 = vmatpush.msra.mxu0 %v28
  %312 = vmatpush.msra.mxu0 %v24
  %313 = vmatmul.f32.gmra.mxu0 %v231
  %v314 = vpop.f32.mrf.mxu0
  %v315 = vadd.f32 0.0, %v314
  %316 = vdwg.mxu0
  %v317 = vadd.f32 %v233, %v255
  %v318 = vadd.f32 %v234, %v275
  %v319 = vadd.f32 %v235, %v295
  %v320 = vadd.f32 %v236, %v315
  %v321 = vxor.u32 %v317, 2147483648
  %v322 = vmul.f32 %v321, 1.442695
  %v323 = vpow.pop %v322
  %v324 = vadd.f32 %v323, 1.0
  %v325 = vrcp.pop %v324
  %v326 = vmul.f32 %v324, %v325
  %v327 = vsub.f32 1.0, %v326
  %v328 = vmul.f32 %v325, %v327
  %v329 = vadd.f32 %v325, %v328
  %vm330 = vweird.f32 %v324
  %vm331 = vweird.f32 %v325
  %vm332 = vmor %vm330, %vm331
  %v333 = vsel %vm332, %v325, %v329
  %v334 = vand.u32 2147483647, %v324
  %vm335 = vcmp.eq.f32.partialorder %v334, 8.507059e+37
  %v336 = vand.u32 %v324, 2147483648
  %v337 = vor.u32 1.1754944e-38, %v336
  %v338 = vsel %vm335, %v337, %v333
  %v339 = vmul.f32 1.0, %v338
  %v340 = vxor.u32 %v318, 2147483648
  %v341 = vmul.f32 %v340, 1.442695
  %v342 = vpow.pop %v341
  %v343 = vadd.f32 %v342, 1.0
  %v344 = vrcp.pop %v343
  %v345 = vmul.f32 %v343, %v344
  %v346 = vsub.f32 1.0, %v345
  %v347 = vmul.f32 %v344, %v346
  %v348 = vadd.f32 %v344, %v347
  %vm349 = vweird.f32 %v343
  %vm350 = vweird.f32 %v344
  %vm351 = vmor %vm349, %vm350
  %v352 = vsel %vm351, %v344, %v348
  %v353 = vand.u32 2147483647, %v343
  %vm354 = vcmp.eq.f32.partialorder %v353, 8.507059e+37
  %v355 = vand.u32 %v343, 2147483648
  %v356 = vor.u32 1.1754944e-38, %v355
  %v357 = vsel %vm354, %v356, %v352
  %v358 = vmul.f32 1.0, %v357
  %v359 = vtanh.pop %v319
  %v360 = vxor.u32 %v320, 2147483648
  %v361 = vmul.f32 %v360, 1.442695
  %v362 = vpow.pop %v361
  %v363 = vadd.f32 %v362, 1.0
  %v364 = vrcp.pop %v363
  %v365 = vmul.f32 %v363, %v364
  %v366 = vsub.f32 1.0, %v365
  %v367 = vmul.f32 %v364, %v366
  %v368 = vadd.f32 %v364, %v367
  %vm369 = vweird.f32 %v363
  %vm370 = vweird.f32 %v364
  %vm371 = vmor %vm369, %vm370
  %v372 = vsel %vm371, %v364, %v368
  %v373 = vand.u32 2147483647, %v363
  %vm374 = vcmp.eq.f32.partialorder %v373, 8.507059e+37
  %v375 = vand.u32 %v363, 2147483648
  %v376 = vor.u32 1.1754944e-38, %v375
  %v377 = vsel %vm374, %v376, %v372
  %v378 = vmul.f32 1.0, %v377
  %v379 = vmul.f32 %v358, %v229
  %v380 = vmul.f32 %v339, %v359
  %v381 = vadd.f32 %v379, %v380
  %v382 = vtanh.pop %v381
  %v383 = vmul.f32 %v378, %v382
  %s384 = scalar_lea.vmem %s0, 64
  %v385 = vld [vmem:[%s384] sm:$0xff]
  %v386 = vld [vmem:[%s384 + $0x8] sm:$0xff]
  %v387 = vld [vmem:[%s384 + $0x10] sm:$0xff]
  %v388 = vld [vmem:[%s384 + $0x18] sm:$0xff]
  %389 = vmatpush.msra.mxu0 %v81
  %390 = vmatpush.msra.mxu0 %v77
  %391 = vmatpush.msra.mxu0 %v73
  %392 = vmatpush.msra.mxu0 %v69
  %393 = vmatpush.msra.mxu0 %v65
  %394 = vmatpush.msra.mxu0 %v61
  %395 = vmatpush.msra.mxu0 %v57
  %396 = vmatpush.msra.mxu0 %v53
  %397 = vmatpush.msra.mxu0 %v49
  %398 = vmatpush.msra.mxu0 %v45
  %399 = vmatpush.msra.mxu0 %v41
  %400 = vmatpush.msra.mxu0 %v37
  %401 = vmatpush.msra.mxu0 %v33
  %402 = vmatpush.msra.mxu0 %v29
  %403 = vmatpush.msra.mxu0 %v25
  %404 = vmatpush.msra.mxu0 %v21
  %405 = vmatmul.f32.gmra.mxu0 %v383
  %v406 = vpop.f32.mrf.mxu0
  %v407 = vadd.f32 0.0, %v406
  %408 = vdwg.mxu0
  %409 = vmatpush.msra.mxu0 %v82
  %410 = vmatpush.msra.mxu0 %v78
  %411 = vmatpush.msra.mxu0 %v74
  %412 = vmatpush.msra.mxu0 %v70
  %413 = vmatpush.msra.mxu0 %v66
  %414 = vmatpush.msra.mxu0 %v62
  %415 = vmatpush.msra.mxu0 %v58
  %416 = vmatpush.msra.mxu0 %v54
  %417 = vmatpush.msra.mxu0 %v50
  %418 = vmatpush.msra.mxu0 %v46
  %419 = vmatpush.msra.mxu0 %v42
  %420 = vmatpush.msra.mxu0 %v38
  %421 = vmatpush.msra.mxu0 %v34
  %422 = vmatpush.msra.mxu0 %v30
  %423 = vmatpush.msra.mxu0 %v26
  %424 = vmatpush.msra.mxu0 %v22
  %425 = vmatmul.f32.gmra.mxu0 %v383
  %v426 = vpop.f32.mrf.mxu0
  %v427 = vadd.f32 0.0, %v426
  %428 = vdwg.mxu0
  %429 = vmatpush.msra.mxu0 %v83
  %430 = vmatpush.msra.mxu0 %v79
  %431 = vmatpush.msra.mxu0 %v75
  %432 = vmatpush.msra.mxu0 %v71
  %433 = vmatpush.msra.mxu0 %v67
  %434 = vmatpush.msra.mxu0 %v63
  %435 = vmatpush.msra.mxu0 %v59
  %436 = vmatpush.msra.mxu0 %v55
  %437 = vmatpush.msra.mxu0 %v51
  %438 = vmatpush.msra.mxu0 %v47
  %439 = vmatpush.msra.mxu0 %v43
  %440 = vmatpush.msra.mxu0 %v39
  %441 = vmatpush.msra.mxu0 %v35
  %442 = vmatpush.msra.mxu0 %v31
  %443 = vmatpush.msra.mxu0 %v27
  %444 = vmatpush.msra.mxu0 %v23
  %445 = vmatmul.f32.gmra.mxu0 %v383
  %v446 = vpop.f32.mrf.mxu0
  %v447 = vadd.f32 0.0, %v446
  %448 = vdwg.mxu0
  %449 = vmatpush.msra.mxu0 %v84
  %450 = vmatpush.msra.mxu0 %v80
  %451 = vmatpush.msra.mxu0 %v76
  %452 = vmatpush.msra.mxu0 %v72
  %453 = vmatpush.msra.mxu0 %v68
  %454 = vmatpush.msra.mxu0 %v64
  %455 = vmatpush.msra.mxu0 %v60
  %456 = vmatpush.msra.mxu0 %v56
  %457 = vmatpush.msra.mxu0 %v52
  %458 = vmatpush.msra.mxu0 %v48
  %459 = vmatpush.msra.mxu0 %v44
  %460 = vmatpush.msra.mxu0 %v40
  %461 = vmatpush.msra.mxu0 %v36
  %462 = vmatpush.msra.mxu0 %v32
  %463 = vmatpush.msra.mxu0 %v28
  %464 = vmatpush.msra.mxu0 %v24
  %465 = vmatmul.f32.gmra.mxu0 %v383
  %v466 = vpop.f32.mrf.mxu0
  %v467 = vadd.f32 0.0, %v466
  %468 = vdwg.mxu0
  %v469 = vadd.f32 %v385, %v407
  %v470 = vadd.f32 %v386, %v427
  %v471 = vadd.f32 %v387, %v447
  %v472 = vadd.f32 %v388, %v467
  %v473 = vxor.u32 %v469, 2147483648
  %v474 = vmul.f32 %v473, 1.442695
  %v475 = vpow.pop %v474
  %v476 = vadd.f32 %v475, 1.0
  %v477 = vrcp.pop %v476
  %v478 = vmul.f32 %v476, %v477
  %v479 = vsub.f32 1.0, %v478
  %v480 = vmul.f32 %v477, %v479
  %v481 = vadd.f32 %v477, %v480
  %vm482 = vweird.f32 %v476
  %vm483 = vweird.f32 %v477
  %vm484 = vmor %vm482, %vm483
  %v485 = vsel %vm484, %v477, %v481
  %v486 = vand.u32 2147483647, %v476
  %vm487 = vcmp.eq.f32.partialorder %v486, 8.507059e+37
  %v488 = vand.u32 %v476, 2147483648
  %v489 = vor.u32 1.1754944e-38, %v488
  %v490 = vsel %vm487, %v489, %v485
  %v491 = vmul.f32 1.0, %v490
  %v492 = vxor.u32 %v470, 2147483648
  %v493 = vmul.f32 %v492, 1.442695
  %v494 = vpow.pop %v493
  %v495 = vadd.f32 %v494, 1.0
  %v496 = vrcp.pop %v495
  %v497 = vmul.f32 %v495, %v496
  %v498 = vsub.f32 1.0, %v497
  %v499 = vmul.f32 %v496, %v498
  %v500 = vadd.f32 %v496, %v499
  %vm501 = vweird.f32 %v495
  %vm502 = vweird.f32 %v496
  %vm503 = vmor %vm501, %vm502
  %v504 = vsel %vm503, %v496, %v500
  %v505 = vand.u32 2147483647, %v495
  %vm506 = vcmp.eq.f32.partialorder %v505, 8.507059e+37
  %v507 = vand.u32 %v495, 2147483648
  %v508 = vor.u32 1.1754944e-38, %v507
  %v509 = vsel %vm506, %v508, %v504
  %v510 = vmul.f32 1.0, %v509
  %v511 = vtanh.pop %v471
  %v512 = vxor.u32 %v472, 2147483648
  %v513 = vmul.f32 %v512, 1.442695
  %v514 = vpow.pop %v513
  %v515 = vadd.f32 %v514, 1.0
  %v516 = vrcp.pop %v515
  %v517 = vmul.f32 %v515, %v516
  %v518 = vsub.f32 1.0, %v517
  %v519 = vmul.f32 %v516, %v518
  %v520 = vadd.f32 %v516, %v519
  %vm521 = vweird.f32 %v515
  %vm522 = vweird.f32 %v516
  %vm523 = vmor %vm521, %vm522
  %v524 = vsel %vm523, %v516, %v520
  %v525 = vand.u32 2147483647, %v515
  %vm526 = vcmp.eq.f32.partialorder %v525, 8.507059e+37
  %v527 = vand.u32 %v515, 2147483648
  %v528 = vor.u32 1.1754944e-38, %v527
  %v529 = vsel %vm526, %v528, %v524
  %v530 = vmul.f32 1.0, %v529
  %v531 = vmul.f32 %v510, %v381
  %v532 = vmul.f32 %v491, %v511
  %v533 = vadd.f32 %v531, %v532
  %v534 = vtanh.pop %v533
  %v535 = vmul.f32 %v530, %v534
  %s536 = scalar_lea.vmem %s0, 96
  %v537 = vld [vmem:[%s536] sm:$0xff]
  %v538 = vld [vmem:[%s536 + $0x8] sm:$0xff]
  %v539 = vld [vmem:[%s536 + $0x10] sm:$0xff]
  %v540 = vld [vmem:[%s536 + $0x18] sm:$0xff]
  %541 = vmatpush.msra.mxu0 %v81
  %542 = vmatpush.msra.mxu0 %v77
  %543 = vmatpush.msra.mxu0 %v73
  %544 = vmatpush.msra.mxu0 %v69
  %545 = vmatpush.msra.mxu0 %v65
  %546 = vmatpush.msra.mxu0 %v61
  %547 = vmatpush.msra.mxu0 %v57
  %548 = vmatpush.msra.mxu0 %v53
  %549 = vmatpush.msra.mxu0 %v49
  %550 = vmatpush.msra.mxu0 %v45
  %551 = vmatpush.msra.mxu0 %v41
  %552 = vmatpush.msra.mxu0 %v37
  %553 = vmatpush.msra.mxu0 %v33
  %554 = vmatpush.msra.mxu0 %v29
  %555 = vmatpush.msra.mxu0 %v25
  %556 = vmatpush.msra.mxu0 %v21
  %557 = vmatmul.f32.gmra.mxu0 %v535
  %v558 = vpop.f32.mrf.mxu0
  %v559 = vadd.f32 0.0, %v558
  %560 = vdwg.mxu0
  %561 = vmatpush.msra.mxu0 %v82
  %562 = vmatpush.msra.mxu0 %v78
  %563 = vmatpush.msra.mxu0 %v74
  %564 = vmatpush.msra.mxu0 %v70
  %565 = vmatpush.msra.mxu0 %v66
  %566 = vmatpush.msra.mxu0 %v62
  %567 = vmatpush.msra.mxu0 %v58
  %568 = vmatpush.msra.mxu0 %v54
  %569 = vmatpush.msra.mxu0 %v50
  %570 = vmatpush.msra.mxu0 %v46
  %571 = vmatpush.msra.mxu0 %v42
  %572 = vmatpush.msra.mxu0 %v38
  %573 = vmatpush.msra.mxu0 %v34
  %574 = vmatpush.msra.mxu0 %v30
  %575 = vmatpush.msra.mxu0 %v26
  %576 = vmatpush.msra.mxu0 %v22
  %577 = vmatmul.f32.gmra.mxu0 %v535
  %v578 = vpop.f32.mrf.mxu0
  %v579 = vadd.f32 0.0, %v578
  %580 = vdwg.mxu0
  %581 = vmatpush.msra.mxu0 %v83
  %582 = vmatpush.msra.mxu0 %v79
  %583 = vmatpush.msra.mxu0 %v75
  %584 = vmatpush.msra.mxu0 %v71
  %585 = vmatpush.msra.mxu0 %v67
  %586 = vmatpush.msra.mxu0 %v63
  %587 = vmatpush.msra.mxu0 %v59
  %588 = vmatpush.msra.mxu0 %v55
  %589 = vmatpush.msra.mxu0 %v51
  %590 = vmatpush.msra.mxu0 %v47
  %591 = vmatpush.msra.mxu0 %v43
  %592 = vmatpush.msra.mxu0 %v39
  %593 = vmatpush.msra.mxu0 %v35
  %594 = vmatpush.msra.mxu0 %v31
  %595 = vmatpush.msra.mxu0 %v27
  %596 = vmatpush.msra.mxu0 %v23
  %597 = vmatmul.f32.gmra.mxu0 %v535
  %v598 = vpop.f32.mrf.mxu0
  %v599 = vadd.f32 0.0, %v598
  %600 = vdwg.mxu0
  %601 = vmatpush.msra.mxu0 %v84
  %602 = vmatpush.msra.mxu0 %v80
  %603 = vmatpush.msra.mxu0 %v76
  %604 = vmatpush.msra.mxu0 %v72
  %605 = vmatpush.msra.mxu0 %v68
  %606 = vmatpush.msra.mxu0 %v64
  %607 = vmatpush.msra.mxu0 %v60
  %608 = vmatpush.msra.mxu0 %v56
  %609 = vmatpush.msra.mxu0 %v52
  %610 = vmatpush.msra.mxu0 %v48
  %611 = vmatpush.msra.mxu0 %v44
  %612 = vmatpush.msra.mxu0 %v40
  %613 = vmatpush.msra.mxu0 %v36
  %614 = vmatpush.msra.mxu0 %v32
  %615 = vmatpush.msra.mxu0 %v28
  %616 = vmatpush.msra.mxu0 %v24
  %617 = vmatmul.f32.gmra.mxu0 %v535
  %v618 = vpop.f32.mrf.mxu0
  %v619 = vadd.f32 0.0, %v618
  %620 = vdwg.mxu0
  %v621 = vadd.f32 %v537, %v559
  %v622 = vadd.f32 %v538, %v579
  %v623 = vadd.f32 %v539, %v599
  %v624 = vadd.f32 %v540, %v619
  %v625 = vxor.u32 %v621, 2147483648
  %v626 = vmul.f32 %v625, 1.442695
  %v627 = vpow.pop %v626
  %v628 = vadd.f32 %v627, 1.0
  %v629 = vrcp.pop %v628
  %v630 = vmul.f32 %v628, %v629
  %v631 = vsub.f32 1.0, %v630
  %v632 = vmul.f32 %v629, %v631
  %v633 = vadd.f32 %v629, %v632
  %vm634 = vweird.f32 %v628
  %vm635 = vweird.f32 %v629
  %vm636 = vmor %vm634, %vm635
  %v637 = vsel %vm636, %v629, %v633
  %v638 = vand.u32 2147483647, %v628
  %vm639 = vcmp.eq.f32.partialorder %v638, 8.507059e+37
  %v640 = vand.u32 %v628, 2147483648
  %v641 = vor.u32 1.1754944e-38, %v640
  %v642 = vsel %vm639, %v641, %v637
  %v643 = vmul.f32 1.0, %v642
  %v644 = vxor.u32 %v622, 2147483648
  %v645 = vmul.f32 %v644, 1.442695
  %v646 = vpow.pop %v645
  %v647 = vadd.f32 %v646, 1.0
  %v648 = vrcp.pop %v647
  %v649 = vmul.f32 %v647, %v648
  %v650 = vsub.f32 1.0, %v649
  %v651 = vmul.f32 %v648, %v650
  %v652 = vadd.f32 %v648, %v651
  %vm653 = vweird.f32 %v647
  %vm654 = vweird.f32 %v648
  %vm655 = vmor %vm653, %vm654
  %v656 = vsel %vm655, %v648, %v652
  %v657 = vand.u32 2147483647, %v647
  %vm658 = vcmp.eq.f32.partialorder %v657, 8.507059e+37
  %v659 = vand.u32 %v647, 2147483648
  %v660 = vor.u32 1.1754944e-38, %v659
  %v661 = vsel %vm658, %v660, %v656
  %v662 = vmul.f32 1.0, %v661
  %v663 = vtanh.pop %v623
  %v664 = vxor.u32 %v624, 2147483648
  %v665 = vmul.f32 %v664, 1.442695
  %v666 = vpow.pop %v665
  %v667 = vadd.f32 %v666, 1.0
  %v668 = vrcp.pop %v667
  %v669 = vmul.f32 %v667, %v668
  %v670 = vsub.f32 1.0, %v669
  %v671 = vmul.f32 %v668, %v670
  %v672 = vadd.f32 %v668, %v671
  %vm673 = vweird.f32 %v667
  %vm674 = vweird.f32 %v668
  %vm675 = vmor %vm673, %vm674
  %v676 = vsel %vm675, %v668, %v672
  %v677 = vand.u32 2147483647, %v667
  %vm678 = vcmp.eq.f32.partialorder %v677, 8.507059e+37
  %v679 = vand.u32 %v667, 2147483648
  %v680 = vor.u32 1.1754944e-38, %v679
  %v681 = vsel %vm678, %v680, %v676
  %v682 = vmul.f32 1.0, %v681
  %v683 = vmul.f32 %v662, %v533
  %v684 = vmul.f32 %v643, %v663
  %v685 = vadd.f32 %v683, %v684
  %v686 = vtanh.pop %v685
  %v687 = vmul.f32 %v682, %v686
  %s688 = scalar_lea.vmem %s0, 128
  %v689 = vld [vmem:[%s688] sm:$0xff]
  %v690 = vld [vmem:[%s688 + $0x8] sm:$0xff]
  %v691 = vld [vmem:[%s688 + $0x10] sm:$0xff]
  %v692 = vld [vmem:[%s688 + $0x18] sm:$0xff]
  %693 = vmatpush.msra.mxu0 %v81
  %694 = vmatpush.msra.mxu0 %v77
  %695 = vmatpush.msra.mxu0 %v73
  %696 = vmatpush.msra.mxu0 %v69
  %697 = vmatpush.msra.mxu0 %v65
  %698 = vmatpush.msra.mxu0 %v61
  %699 = vmatpush.msra.mxu0 %v57
  %700 = vmatpush.msra.mxu0 %v53
  %701 = vmatpush.msra.mxu0 %v49
  %702 = vmatpush.msra.mxu0 %v45
  %703 = vmatpush.msra.mxu0 %v41
  %704 = vmatpush.msra.mxu0 %v37
  %705 = vmatpush.msra.mxu0 %v33
  %706 = vmatpush.msra.mxu0 %v29
  %707 = vmatpush.msra.mxu0 %v25
  %708 = vmatpush.msra.mxu0 %v21
  %709 = vmatmul.f32.gmra.mxu0 %v687
  %v710 = vpop.f32.mrf.mxu0
  %v711 = vadd.f32 0.0, %v710
  %712 = vdwg.mxu0
  %713 = vmatpush.msra.mxu0 %v82
  %714 = vmatpush.msra.mxu0 %v78
  %715 = vmatpush.msra.mxu0 %v74
  %716 = vmatpush.msra.mxu0 %v70
  %717 = vmatpush.msra.mxu0 %v66
  %718 = vmatpush.msra.mxu0 %v62
  %719 = vmatpush.msra.mxu0 %v58
  %720 = vmatpush.msra.mxu0 %v54
  %721 = vmatpush.msra.mxu0 %v50
  %722 = vmatpush.msra.mxu0 %v46
  %723 = vmatpush.msra.mxu0 %v42
  %724 = vmatpush.msra.mxu0 %v38
  %725 = vmatpush.msra.mxu0 %v34
  %726 = vmatpush.msra.mxu0 %v30
  %727 = vmatpush.msra.mxu0 %v26
  %728 = vmatpush.msra.mxu0 %v22
  %729 = vmatmul.f32.gmra.mxu0 %v687
  %v730 = vpop.f32.mrf.mxu0
  %v731 = vadd.f32 0.0, %v730
  %732 = vdwg.mxu0
  %733 = vmatpush.msra.mxu0 %v83
  %734 = vmatpush.msra.mxu0 %v79
  %735 = vmatpush.msra.mxu0 %v75
  %736 = vmatpush.msra.mxu0 %v71
  %737 = vmatpush.msra.mxu0 %v67
  %738 = vmatpush.msra.mxu0 %v63
  %739 = vmatpush.msra.mxu0 %v59
  %740 = vmatpush.msra.mxu0 %v55
  %741 = vmatpush.msra.mxu0 %v51
  %742 = vmatpush.msra.mxu0 %v47
  %743 = vmatpush.msra.mxu0 %v43
  %744 = vmatpush.msra.mxu0 %v39
  %745 = vmatpush.msra.mxu0 %v35
  %746 = vmatpush.msra.mxu0 %v31
  %747 = vmatpush.msra.mxu0 %v27
  %748 = vmatpush.msra.mxu0 %v23
  %749 = vmatmul.f32.gmra.mxu0 %v687
  %v750 = vpop.f32.mrf.mxu0
  %v751 = vadd.f32 0.0, %v750
  %752 = vdwg.mxu0
  %753 = vmatpush.msra.mxu0 %v84
  %754 = vmatpush.msra.mxu0 %v80
  %755 = vmatpush.msra.mxu0 %v76
  %756 = vmatpush.msra.mxu0 %v72
  %757 = vmatpush.msra.mxu0 %v68
  %758 = vmatpush.msra.mxu0 %v64
  %759 = vmatpush.msra.mxu0 %v60
  %760 = vmatpush.msra.mxu0 %v56
  %761 = vmatpush.msra.mxu0 %v52
  %762 = vmatpush.msra.mxu0 %v48
  %763 = vmatpush.msra.mxu0 %v44
  %764 = vmatpush.msra.mxu0 %v40
  %765 = vmatpush.msra.mxu0 %v36
  %766 = vmatpush.msra.mxu0 %v32
  %767 = vmatpush.msra.mxu0 %v28
  %768 = vmatpush.msra.mxu0 %v24
  %769 = vmatmul.f32.gmra.mxu0 %v687
  %v770 = vpop.f32.mrf.mxu0
  %v771 = vadd.f32 0.0, %v770
  %772 = vdwg.mxu0
  %v773 = vadd.f32 %v689, %v711
  %v774 = vadd.f32 %v690, %v731
  %v775 = vadd.f32 %v691, %v751
  %v776 = vadd.f32 %v692, %v771
  %v777 = vxor.u32 %v773, 2147483648
  %v778 = vmul.f32 %v777, 1.442695
  %v779 = vpow.pop %v778
  %v780 = vadd.f32 %v779, 1.0
  %v781 = vrcp.pop %v780
  %v782 = vmul.f32 %v780, %v781
  %v783 = vsub.f32 1.0, %v782
  %v784 = vmul.f32 %v781, %v783
  %v785 = vadd.f32 %v781, %v784
  %vm786 = vweird.f32 %v780
  %vm787 = vweird.f32 %v781
  %vm788 = vmor %vm786, %vm787
  %v789 = vsel %vm788, %v781, %v785
  %v790 = vand.u32 2147483647, %v780
  %vm791 = vcmp.eq.f32.partialorder %v790, 8.507059e+37
  %v792 = vand.u32 %v780, 2147483648
  %v793 = vor.u32 1.1754944e-38, %v792
  %v794 = vsel %vm791, %v793, %v789
  %v795 = vmul.f32 1.0, %v794
  %v796 = vxor.u32 %v774, 2147483648
  %v797 = vmul.f32 %v796, 1.442695
  %v798 = vpow.pop %v797
  %v799 = vadd.f32 %v798, 1.0
  %v800 = vrcp.pop %v799
  %v801 = vmul.f32 %v799, %v800
  %v802 = vsub.f32 1.0, %v801
  %v803 = vmul.f32 %v800, %v802
  %v804 = vadd.f32 %v800, %v803
  %vm805 = vweird.f32 %v799
  %vm806 = vweird.f32 %v800
  %vm807 = vmor %vm805, %vm806
  %v808 = vsel %vm807, %v800, %v804
  %v809 = vand.u32 2147483647, %v799
  %vm810 = vcmp.eq.f32.partialorder %v809, 8.507059e+37
  %v811 = vand.u32 %v799, 2147483648
  %v812 = vor.u32 1.1754944e-38, %v811
  %v813 = vsel %vm810, %v812, %v808
  %v814 = vmul.f32 1.0, %v813
  %v815 = vtanh.pop %v775
  %v816 = vxor.u32 %v776, 2147483648
  %v817 = vmul.f32 %v816, 1.442695
  %v818 = vpow.pop %v817
  %v819 = vadd.f32 %v818, 1.0
  %v820 = vrcp.pop %v819
  %v821 = vmul.f32 %v819, %v820
  %v822 = vsub.f32 1.0, %v821
  %v823 = vmul.f32 %v820, %v822
  %v824 = vadd.f32 %v820, %v823
  %vm825 = vweird.f32 %v819
  %vm826 = vweird.f32 %v820
  %vm827 = vmor %vm825, %vm826
  %v828 = vsel %vm827, %v820, %v824
  %v829 = vand.u32 2147483647, %v819
  %vm830 = vcmp.eq.f32.partialorder %v829, 8.507059e+37
  %v831 = vand.u32 %v819, 2147483648
  %v832 = vor.u32 1.1754944e-38, %v831
  %v833 = vsel %vm830, %v832, %v828
  %v834 = vmul.f32 1.0, %v833
  %v835 = vmul.f32 %v814, %v685
  %v836 = vmul.f32 %v795, %v815
  %v837 = vadd.f32 %v835, %v836
  %v838 = vtanh.pop %v837
  %v839 = vmul.f32 %v834, %v838
  %s840 = scalar_lea.vmem %s0, 160
  %v841 = vld [vmem:[%s840] sm:$0xff]
  %v842 = vld [vmem:[%s840 + $0x8] sm:$0xff]
  %v843 = vld [vmem:[%s840 + $0x10] sm:$0xff]
  %v844 = vld [vmem:[%s840 + $0x18] sm:$0xff]
  %845 = vmatpush.msra.mxu0 %v81
  %846 = vmatpush.msra.mxu0 %v77
  %847 = vmatpush.msra.mxu0 %v73
  %848 = vmatpush.msra.mxu0 %v69
  %849 = vmatpush.msra.mxu0 %v65
  %850 = vmatpush.msra.mxu0 %v61
  %851 = vmatpush.msra.mxu0 %v57
  %852 = vmatpush.msra.mxu0 %v53
  %853 = vmatpush.msra.mxu0 %v49
  %854 = vmatpush.msra.mxu0 %v45
  %855 = vmatpush.msra.mxu0 %v41
  %856 = vmatpush.msra.mxu0 %v37
  %857 = vmatpush.msra.mxu0 %v33
  %858 = vmatpush.msra.mxu0 %v29
  %859 = vmatpush.msra.mxu0 %v25
  %860 = vmatpush.msra.mxu0 %v21
  %861 = vmatmul.f32.gmra.mxu0 %v839
  %v862 = vpop.f32.mrf.mxu0
  %v863 = vadd.f32 0.0, %v862
  %864 = vdwg.mxu0
  %865 = vmatpush.msra.mxu0 %v82
  %866 = vmatpush.msra.mxu0 %v78
  %867 = vmatpush.msra.mxu0 %v74
  %868 = vmatpush.msra.mxu0 %v70
  %869 = vmatpush.msra.mxu0 %v66
  %870 = vmatpush.msra.mxu0 %v62
  %871 = vmatpush.msra.mxu0 %v58
  %872 = vmatpush.msra.mxu0 %v54
  %873 = vmatpush.msra.mxu0 %v50
  %874 = vmatpush.msra.mxu0 %v46
  %875 = vmatpush.msra.mxu0 %v42
  %876 = vmatpush.msra.mxu0 %v38
  %877 = vmatpush.msra.mxu0 %v34
  %878 = vmatpush.msra.mxu0 %v30
  %879 = vmatpush.msra.mxu0 %v26
  %880 = vmatpush.msra.mxu0 %v22
  %881 = vmatmul.f32.gmra.mxu0 %v839
  %v882 = vpop.f32.mrf.mxu0
  %v883 = vadd.f32 0.0, %v882
  %884 = vdwg.mxu0
  %885 = vmatpush.msra.mxu0 %v83
  %886 = vmatpush.msra.mxu0 %v79
  %887 = vmatpush.msra.mxu0 %v75
  %888 = vmatpush.msra.mxu0 %v71
  %889 = vmatpush.msra.mxu0 %v67
  %890 = vmatpush.msra.mxu0 %v63
  %891 = vmatpush.msra.mxu0 %v59
  %892 = vmatpush.msra.mxu0 %v55
  %893 = vmatpush.msra.mxu0 %v51
  %894 = vmatpush.msra.mxu0 %v47
  %895 = vmatpush.msra.mxu0 %v43
  %896 = vmatpush.msra.mxu0 %v39
  %897 = vmatpush.msra.mxu0 %v35
  %898 = vmatpush.msra.mxu0 %v31
  %899 = vmatpush.msra.mxu0 %v27
  %900 = vmatpush.msra.mxu0 %v23
  %901 = vmatmul.f32.gmra.mxu0 %v839
  %v902 = vpop.f32.mrf.mxu0
  %v903 = vadd.f32 0.0, %v902
  %904 = vdwg.mxu0
  %905 = vmatpush.msra.mxu0 %v84
  %906 = vmatpush.msra.mxu0 %v80
  %907 = vmatpush.msra.mxu0 %v76
  %908 = vmatpush.msra.mxu0 %v72
  %909 = vmatpush.msra.mxu0 %v68
  %910 = vmatpush.msra.mxu0 %v64
  %911 = vmatpush.msra.mxu0 %v60
  %912 = vmatpush.msra.mxu0 %v56
  %913 = vmatpush.msra.mxu0 %v52
  %914 = vmatpush.msra.mxu0 %v48
  %915 = vmatpush.msra.mxu0 %v44
  %916 = vmatpush.msra.mxu0 %v40
  %917 = vmatpush.msra.mxu0 %v36
  %918 = vmatpush.msra.mxu0 %v32
  %919 = vmatpush.msra.mxu0 %v28
  %920 = vmatpush.msra.mxu0 %v24
  %921 = vmatmul.f32.gmra.mxu0 %v839
  %v922 = vpop.f32.mrf.mxu0
  %v923 = vadd.f32 0.0, %v922
  %924 = vdwg.mxu0
  %v925 = vadd.f32 %v841, %v863
  %v926 = vadd.f32 %v842, %v883
  %v927 = vadd.f32 %v843, %v903
  %v928 = vadd.f32 %v844, %v923
  %v929 = vxor.u32 %v925, 2147483648
  %v930 = vmul.f32 %v929, 1.442695
  %v931 = vpow.pop %v930
  %v932 = vadd.f32 %v931, 1.0
  %v933 = vrcp.pop %v932
  %v934 = vmul.f32 %v932, %v933
  %v935 = vsub.f32 1.0, %v934
  %v936 = vmul.f32 %v933, %v935
  %v937 = vadd.f32 %v933, %v936
  %vm938 = vweird.f32 %v932
  %vm939 = vweird.f32 %v933
  %vm940 = vmor %vm938, %vm939
  %v941 = vsel %vm940, %v933, %v937
  %v942 = vand.u32 2147483647, %v932
  %vm943 = vcmp.eq.f32.partialorder %v942, 8.507059e+37
  %v944 = vand.u32 %v932, 2147483648
  %v945 = vor.u32 1.1754944e-38, %v944
  %v946 = vsel %vm943, %v945, %v941
  %v947 = vmul.f32 1.0, %v946
  %v948 = vxor.u32 %v926, 2147483648
  %v949 = vmul.f32 %v948, 1.442695
  %v950 = vpow.pop %v949
  %v951 = vadd.f32 %v950, 1.0
  %v952 = vrcp.pop %v951
  %v953 = vmul.f32 %v951, %v952
  %v954 = vsub.f32 1.0, %v953
  %v955 = vmul.f32 %v952, %v954
  %v956 = vadd.f32 %v952, %v955
  %vm957 = vweird.f32 %v951
  %vm958 = vweird.f32 %v952
  %vm959 = vmor %vm957, %vm958
  %v960 = vsel %vm959, %v952, %v956
  %v961 = vand.u32 2147483647, %v951
  %vm962 = vcmp.eq.f32.partialorder %v961, 8.507059e+37
  %v963 = vand.u32 %v951, 2147483648
  %v964 = vor.u32 1.1754944e-38, %v963
  %v965 = vsel %vm962, %v964, %v960
  %v966 = vmul.f32 1.0, %v965
  %v967 = vtanh.pop %v927
  %v968 = vxor.u32 %v928, 2147483648
  %v969 = vmul.f32 %v968, 1.442695
  %v970 = vpow.pop %v969
  %v971 = vadd.f32 %v970, 1.0
  %v972 = vrcp.pop %v971
  %v973 = vmul.f32 %v971, %v972
  %v974 = vsub.f32 1.0, %v973
  %v975 = vmul.f32 %v972, %v974
  %v976 = vadd.f32 %v972, %v975
  %vm977 = vweird.f32 %v971
  %vm978 = vweird.f32 %v972
  %vm979 = vmor %vm977, %vm978
  %v980 = vsel %vm979, %v972, %v976
  %v981 = vand.u32 2147483647, %v971
  %vm982 = vcmp.eq.f32.partialorder %v981, 8.507059e+37
  %v983 = vand.u32 %v971, 2147483648
  %v984 = vor.u32 1.1754944e-38, %v983
  %v985 = vsel %vm982, %v984, %v980
  %v986 = vmul.f32 1.0, %v985
  %v987 = vmul.f32 %v966, %v837
  %v988 = vmul.f32 %v947, %v967
  %v989 = vadd.f32 %v987, %v988
  %v990 = vtanh.pop %v989
  %v991 = vmul.f32 %v986, %v990
  %s992 = scalar_lea.vmem %s0, 192
  %v993 = vld [vmem:[%s992] sm:$0xff]
  %v994 = vld [vmem:[%s992 + $0x8] sm:$0xff]
  %v995 = vld [vmem:[%s992 + $0x10] sm:$0xff]
  %v996 = vld [vmem:[%s992 + $0x18] sm:$0xff]
  %997 = vmatpush.msra.mxu0 %v81
  %998 = vmatpush.msra.mxu0 %v77
  %999 = vmatpush.msra.mxu0 %v73
  %1000 = vmatpush.msra.mxu0 %v69
  %1001 = vmatpush.msra.mxu0 %v65
  %1002 = vmatpush.msra.mxu0 %v61
  %1003 = vmatpush.msra.mxu0 %v57
  %1004 = vmatpush.msra.mxu0 %v53
  %1005 = vmatpush.msra.mxu0 %v49
  %1006 = vmatpush.msra.mxu0 %v45
  %1007 = vmatpush.msra.mxu0 %v41
  %1008 = vmatpush.msra.mxu0 %v37
  %1009 = vmatpush.msra.mxu0 %v33
  %1010 = vmatpush.msra.mxu0 %v29
  %1011 = vmatpush.msra.mxu0 %v25
  %1012 = vmatpush.msra.mxu0 %v21
  %1013 = vmatmul.f32.gmra.mxu0 %v991
  %v1014 = vpop.f32.mrf.mxu0
  %v1015 = vadd.f32 0.0, %v1014
  %1016 = vdwg.mxu0
  %1017 = vmatpush.msra.mxu0 %v82
  %1018 = vmatpush.msra.mxu0 %v78
  %1019 = vmatpush.msra.mxu0 %v74
  %1020 = vmatpush.msra.mxu0 %v70
  %1021 = vmatpush.msra.mxu0 %v66
  %1022 = vmatpush.msra.mxu0 %v62
  %1023 = vmatpush.msra.mxu0 %v58
  %1024 = vmatpush.msra.mxu0 %v54
  %1025 = vmatpush.msra.mxu0 %v50
  %1026 = vmatpush.msra.mxu0 %v46
  %1027 = vmatpush.msra.mxu0 %v42
  %1028 = vmatpush.msra.mxu0 %v38
  %1029 = vmatpush.msra.mxu0 %v34
  %1030 = vmatpush.msra.mxu0 %v30
  %1031 = vmatpush.msra.mxu0 %v26
  %1032 = vmatpush.msra.mxu0 %v22
  %1033 = vmatmul.f32.gmra.mxu0 %v991
  %v1034 = vpop.f32.mrf.mxu0
  %v1035 = vadd.f32 0.0, %v1034
  %1036 = vdwg.mxu0
  %1037 = vmatpush.msra.mxu0 %v83
  %1038 = vmatpush.msra.mxu0 %v79
  %1039 = vmatpush.msra.mxu0 %v75
  %1040 = vmatpush.msra.mxu0 %v71
  %1041 = vmatpush.msra.mxu0 %v67
  %1042 = vmatpush.msra.mxu0 %v63
  %1043 = vmatpush.msra.mxu0 %v59
  %1044 = vmatpush.msra.mxu0 %v55
  %1045 = vmatpush.msra.mxu0 %v51
  %1046 = vmatpush.msra.mxu0 %v47
  %1047 = vmatpush.msra.mxu0 %v43
  %1048 = vmatpush.msra.mxu0 %v39
  %1049 = vmatpush.msra.mxu0 %v35
  %1050 = vmatpush.msra.mxu0 %v31
  %1051 = vmatpush.msra.mxu0 %v27
  %1052 = vmatpush.msra.mxu0 %v23
  %1053 = vmatmul.f32.gmra.mxu0 %v991
  %v1054 = vpop.f32.mrf.mxu0
  %v1055 = vadd.f32 0.0, %v1054
  %1056 = vdwg.mxu0
  %1057 = vmatpush.msra.mxu0 %v84
  %1058 = vmatpush.msra.mxu0 %v80
  %1059 = vmatpush.msra.mxu0 %v76
  %1060 = vmatpush.msra.mxu0 %v72
  %1061 = vmatpush.msra.mxu0 %v68
  %1062 = vmatpush.msra.mxu0 %v64
  %1063 = vmatpush.msra.mxu0 %v60
  %1064 = vmatpush.msra.mxu0 %v56
  %1065 = vmatpush.msra.mxu0 %v52
  %1066 = vmatpush.msra.mxu0 %v48
  %1067 = vmatpush.msra.mxu0 %v44
  %1068 = vmatpush.msra.mxu0 %v40
  %1069 = vmatpush.msra.mxu0 %v36
  %1070 = vmatpush.msra.mxu0 %v32
  %1071 = vmatpush.msra.mxu0 %v28
  %1072 = vmatpush.msra.mxu0 %v24
  %1073 = vmatmul.f32.gmra.mxu0 %v991
  %v1074 = vpop.f32.mrf.mxu0
  %v1075 = vadd.f32 0.0, %v1074
  %1076 = vdwg.mxu0
  %v1077 = vadd.f32 %v993, %v1015
  %v1078 = vadd.f32 %v994, %v1035
  %v1079 = vadd.f32 %v995, %v1055
  %v1080 = vadd.f32 %v996, %v1075
  %v1081 = vxor.u32 %v1077, 2147483648
  %v1082 = vmul.f32 %v1081, 1.442695
  %v1083 = vpow.pop %v1082
  %v1084 = vadd.f32 %v1083, 1.0
  %v1085 = vrcp.pop %v1084
  %v1086 = vmul.f32 %v1084, %v1085
  %v1087 = vsub.f32 1.0, %v1086
  %v1088 = vmul.f32 %v1085, %v1087
  %v1089 = vadd.f32 %v1085, %v1088
  %vm1090 = vweird.f32 %v1084
  %vm1091 = vweird.f32 %v1085
  %vm1092 = vmor %vm1090, %vm1091
  %v1093 = vsel %vm1092, %v1085, %v1089
  %v1094 = vand.u32 2147483647, %v1084
  %vm1095 = vcmp.eq.f32.partialorder %v1094, 8.507059e+37
  %v1096 = vand.u32 %v1084, 2147483648
  %v1097 = vor.u32 1.1754944e-38, %v1096
  %v1098 = vsel %vm1095, %v1097, %v1093
  %v1099 = vmul.f32 1.0, %v1098
  %v1100 = vxor.u32 %v1078, 2147483648
  %v1101 = vmul.f32 %v1100, 1.442695
  %v1102 = vpow.pop %v1101
  %v1103 = vadd.f32 %v1102, 1.0
  %v1104 = vrcp.pop %v1103
  %v1105 = vmul.f32 %v1103, %v1104
  %v1106 = vsub.f32 1.0, %v1105
  %v1107 = vmul.f32 %v1104, %v1106
  %v1108 = vadd.f32 %v1104, %v1107
  %vm1109 = vweird.f32 %v1103
  %vm1110 = vweird.f32 %v1104
  %vm1111 = vmor %vm1109, %vm1110
  %v1112 = vsel %vm1111, %v1104, %v1108
  %v1113 = vand.u32 2147483647, %v1103
  %vm1114 = vcmp.eq.f32.partialorder %v1113, 8.507059e+37
  %v1115 = vand.u32 %v1103, 2147483648
  %v1116 = vor.u32 1.1754944e-38, %v1115
  %v1117 = vsel %vm1114, %v1116, %v1112
  %v1118 = vmul.f32 1.0, %v1117
  %v1119 = vtanh.pop %v1079
  %v1120 = vxor.u32 %v1080, 2147483648
  %v1121 = vmul.f32 %v1120, 1.442695
  %v1122 = vpow.pop %v1121
  %v1123 = vadd.f32 %v1122, 1.0
  %v1124 = vrcp.pop %v1123
  %v1125 = vmul.f32 %v1123, %v1124
  %v1126 = vsub.f32 1.0, %v1125
  %v1127 = vmul.f32 %v1124, %v1126
  %v1128 = vadd.f32 %v1124, %v1127
  %vm1129 = vweird.f32 %v1123
  %vm1130 = vweird.f32 %v1124
  %vm1131 = vmor %vm1129, %vm1130
  %v1132 = vsel %vm1131, %v1124, %v1128
  %v1133 = vand.u32 2147483647, %v1123
  %vm1134 = vcmp.eq.f32.partialorder %v1133, 8.507059e+37
  %v1135 = vand.u32 %v1123, 2147483648
  %v1136 = vor.u32 1.1754944e-38, %v1135
  %v1137 = vsel %vm1134, %v1136, %v1132
  %v1138 = vmul.f32 1.0, %v1137
  %v1139 = vmul.f32 %v1118, %v989
  %v1140 = vmul.f32 %v1099, %v1119
  %v1141 = vadd.f32 %v1139, %v1140
  %v1142 = vtanh.pop %v1141
  %v1143 = vmul.f32 %v1138, %v1142
  %s1144 = scalar_lea.vmem %s0, 224
  %v1145 = vld [vmem:[%s1144] sm:$0xff]
  %v1146 = vld [vmem:[%s1144 + $0x8] sm:$0xff]
  %v1147 = vld [vmem:[%s1144 + $0x10] sm:$0xff]
  %v1148 = vld [vmem:[%s1144 + $0x18] sm:$0xff]
  %1149 = vmatpush.msra.mxu0 %v81
  %1150 = vmatpush.msra.mxu0 %v77
  %1151 = vmatpush.msra.mxu0 %v73
  %1152 = vmatpush.msra.mxu0 %v69
  %1153 = vmatpush.msra.mxu0 %v65
  %1154 = vmatpush.msra.mxu0 %v61
  %1155 = vmatpush.msra.mxu0 %v57
  %1156 = vmatpush.msra.mxu0 %v53
  %1157 = vmatpush.msra.mxu0 %v49
  %1158 = vmatpush.msra.mxu0 %v45
  %1159 = vmatpush.msra.mxu0 %v41
  %1160 = vmatpush.msra.mxu0 %v37
  %1161 = vmatpush.msra.mxu0 %v33
  %1162 = vmatpush.msra.mxu0 %v29
  %1163 = vmatpush.msra.mxu0 %v25
  %1164 = vmatpush.msra.mxu0 %v21
  %1165 = vmatmul.f32.gmra.mxu0 %v1143
  %v1166 = vpop.f32.mrf.mxu0
  %v1167 = vadd.f32 0.0, %v1166
  %1168 = vdwg.mxu0
  %1169 = vmatpush.msra.mxu0 %v82
  %1170 = vmatpush.msra.mxu0 %v78
  %1171 = vmatpush.msra.mxu0 %v74
  %1172 = vmatpush.msra.mxu0 %v70
  %1173 = vmatpush.msra.mxu0 %v66
  %1174 = vmatpush.msra.mxu0 %v62
  %1175 = vmatpush.msra.mxu0 %v58
  %1176 = vmatpush.msra.mxu0 %v54
  %1177 = vmatpush.msra.mxu0 %v50
  %1178 = vmatpush.msra.mxu0 %v46
  %1179 = vmatpush.msra.mxu0 %v42
  %1180 = vmatpush.msra.mxu0 %v38
  %1181 = vmatpush.msra.mxu0 %v34
  %1182 = vmatpush.msra.mxu0 %v30
  %1183 = vmatpush.msra.mxu0 %v26
  %1184 = vmatpush.msra.mxu0 %v22
  %1185 = vmatmul.f32.gmra.mxu0 %v1143
  %v1186 = vpop.f32.mrf.mxu0
  %v1187 = vadd.f32 0.0, %v1186
  %1188 = vdwg.mxu0
  %1189 = vmatpush.msra.mxu0 %v83
  %1190 = vmatpush.msra.mxu0 %v79
  %1191 = vmatpush.msra.mxu0 %v75
  %1192 = vmatpush.msra.mxu0 %v71
  %1193 = vmatpush.msra.mxu0 %v67
  %1194 = vmatpush.msra.mxu0 %v63
  %1195 = vmatpush.msra.mxu0 %v59
  %1196 = vmatpush.msra.mxu0 %v55
  %1197 = vmatpush.msra.mxu0 %v51
  %1198 = vmatpush.msra.mxu0 %v47
  %1199 = vmatpush.msra.mxu0 %v43
  %1200 = vmatpush.msra.mxu0 %v39
  %1201 = vmatpush.msra.mxu0 %v35
  %1202 = vmatpush.msra.mxu0 %v31
  %1203 = vmatpush.msra.mxu0 %v27
  %1204 = vmatpush.msra.mxu0 %v23
  %1205 = vmatmul.f32.gmra.mxu0 %v1143
  %v1206 = vpop.f32.mrf.mxu0
  %v1207 = vadd.f32 0.0, %v1206
  %1208 = vdwg.mxu0
  %1209 = vmatpush.msra.mxu0 %v84
  %1210 = vmatpush.msra.mxu0 %v80
  %1211 = vmatpush.msra.mxu0 %v76
  %1212 = vmatpush.msra.mxu0 %v72
  %1213 = vmatpush.msra.mxu0 %v68
  %1214 = vmatpush.msra.mxu0 %v64
  %1215 = vmatpush.msra.mxu0 %v60
  %1216 = vmatpush.msra.mxu0 %v56
  %1217 = vmatpush.msra.mxu0 %v52
  %1218 = vmatpush.msra.mxu0 %v48
  %1219 = vmatpush.msra.mxu0 %v44
  %1220 = vmatpush.msra.mxu0 %v40
  %1221 = vmatpush.msra.mxu0 %v36
  %1222 = vmatpush.msra.mxu0 %v32
  %1223 = vmatpush.msra.mxu0 %v28
  %1224 = vmatpush.msra.mxu0 %v24
  %1225 = vmatmul.f32.gmra.mxu0 %v1143
  %v1226 = vpop.f32.mrf.mxu0
  %v1227 = vadd.f32 0.0, %v1226
  %1228 = vdwg.mxu0
  %v1229 = vadd.f32 %v1145, %v1167
  %v1230 = vadd.f32 %v1146, %v1187
  %v1231 = vadd.f32 %v1147, %v1207
  %v1232 = vadd.f32 %v1148, %v1227
  %v1233 = vxor.u32 %v1229, 2147483648
  %v1234 = vmul.f32 %v1233, 1.442695
  %v1235 = vpow.pop %v1234
  %v1236 = vadd.f32 %v1235, 1.0
  %v1237 = vrcp.pop %v1236
  %v1238 = vmul.f32 %v1236, %v1237
  %v1239 = vsub.f32 1.0, %v1238
  %v1240 = vmul.f32 %v1237, %v1239
  %v1241 = vadd.f32 %v1237, %v1240
  %vm1242 = vweird.f32 %v1236
  %vm1243 = vweird.f32 %v1237
  %vm1244 = vmor %vm1242, %vm1243
  %v1245 = vsel %vm1244, %v1237, %v1241
  %v1246 = vand.u32 2147483647, %v1236
  %vm1247 = vcmp.eq.f32.partialorder %v1246, 8.507059e+37
  %v1248 = vand.u32 %v1236, 2147483648
  %v1249 = vor.u32 1.1754944e-38, %v1248
  %v1250 = vsel %vm1247, %v1249, %v1245
  %v1251 = vmul.f32 1.0, %v1250
  %v1252 = vxor.u32 %v1230, 2147483648
  %v1253 = vmul.f32 %v1252, 1.442695
  %v1254 = vpow.pop %v1253
  %v1255 = vadd.f32 %v1254, 1.0
  %v1256 = vrcp.pop %v1255
  %v1257 = vmul.f32 %v1255, %v1256
  %v1258 = vsub.f32 1.0, %v1257
  %v1259 = vmul.f32 %v1256, %v1258
  %v1260 = vadd.f32 %v1256, %v1259
  %vm1261 = vweird.f32 %v1255
  %vm1262 = vweird.f32 %v1256
  %vm1263 = vmor %vm1261, %vm1262
  %v1264 = vsel %vm1263, %v1256, %v1260
  %v1265 = vand.u32 2147483647, %v1255
  %vm1266 = vcmp.eq.f32.partialorder %v1265, 8.507059e+37
  %v1267 = vand.u32 %v1255, 2147483648
  %v1268 = vor.u32 1.1754944e-38, %v1267
  %v1269 = vsel %vm1266, %v1268, %v1264
  %v1270 = vmul.f32 1.0, %v1269
  %v1271 = vtanh.pop %v1231
  %v1272 = vxor.u32 %v1232, 2147483648
  %v1273 = vmul.f32 %v1272, 1.442695
  %v1274 = vpow.pop %v1273
  %v1275 = vadd.f32 %v1274, 1.0
  %v1276 = vrcp.pop %v1275
  %v1277 = vmul.f32 %v1275, %v1276
  %v1278 = vsub.f32 1.0, %v1277
  %v1279 = vmul.f32 %v1276, %v1278
  %v1280 = vadd.f32 %v1276, %v1279
  %vm1281 = vweird.f32 %v1275
  %vm1282 = vweird.f32 %v1276
  %vm1283 = vmor %vm1281, %vm1282
  %v1284 = vsel %vm1283, %v1276, %v1280
  %v1285 = vand.u32 2147483647, %v1275
  %vm1286 = vcmp.eq.f32.partialorder %v1285, 8.507059e+37
  %v1287 = vand.u32 %v1275, 2147483648
  %v1288 = vor.u32 1.1754944e-38, %v1287
  %v1289 = vsel %vm1286, %v1288, %v1284
  %v1290 = vmul.f32 1.0, %v1289
  %v1291 = vmul.f32 %v1270, %v1141
  %v1292 = vmul.f32 %v1251, %v1271
  %v1293 = vadd.f32 %v1291, %v1292
  %v1294 = vtanh.pop %v1293
  %v1295 = vmul.f32 %v1290, %v1294
  %v1296 = vld [vmem:[%s2] sm:$0xff]
  %v1297 = vld [vmem:[%s2 + $0x8] sm:$0xff]
  %v1298 = vld [vmem:[%s2 + $0x10] sm:$0xff]
  %v1299 = vld [vmem:[%s2 + $0x18] sm:$0xff]
  %v1300 = vld [vmem:[%s2 + $0x20] sm:$0xff]
  %v1301 = vld [vmem:[%s2 + $0x28] sm:$0xff]
  %v1302 = vld [vmem:[%s2 + $0x30] sm:$0xff]
  %v1303 = vld [vmem:[%s2 + $0x38] sm:$0xff]
  %v1304 = vld [vmem:[%s2 + $0x40] sm:$0xff]
  %v1305 = vld [vmem:[%s2 + $0x48] sm:$0xff]
  %v1306 = vld [vmem:[%s2 + $0x50] sm:$0xff]
  %v1307 = vld [vmem:[%s2 + $0x58] sm:$0xff]
  %v1308 = vld [vmem:[%s2 + $0x60] sm:$0xff]
  %v1309 = vld [vmem:[%s2 + $0x68] sm:$0xff]
  %v1310 = vld [vmem:[%s2 + $0x70] sm:$0xff]
  %v1311 = vld [vmem:[%s2 + $0x78] sm:$0xff]
  %v1312 = vld [vmem:[%s3] sm:$0x1]
  %v1314 = vperm.slane %v1312, 0
  %1316 = vmatpush.msra.mxu0 %v1311
  %1317 = vmatpush.msra.mxu0 %v1310
  %1318 = vmatpush.msra.mxu0 %v1309
  %1319 = vmatpush.msra.mxu0 %v1308
  %1320 = vmatpush.msra.mxu0 %v1307
  %1321 = vmatpush.msra.mxu0 %v1306
  %1322 = vmatpush.msra.mxu0 %v1305
  %1323 = vmatpush.msra.mxu0 %v1304
  %1324 = vmatpush.msra.mxu0 %v1303
  %1325 = vmatpush.msra.mxu0 %v1302
  %1326 = vmatpush.msra.mxu0 %v1301
  %1327 = vmatpush.msra.mxu0 %v1300
  %1328 = vmatpush.msra.mxu0 %v1299
  %1329 = vmatpush.msra.mxu0 %v1298
  %1330 = vmatpush.msra.mxu0 %v1297
  %1331 = vmatpush.msra.mxu0 %v1296
  %1332 = vmatmul.f32.gmra.mxu0 %v1295
  %v1333 = vpop.f32.mrf.mxu0
  %v1334 = vadd.f32 %v1314, %v1333
  %1335 = vdwg.mxu0
  %1336 = vmax.xlane.f32.xlu0 %v1334
  %v1337 = vpop.xlane.xlu0 %1336
  %v1338 = vsub.f32 %v1334, %v1337
  %v1339 = vmul.f32 %v1338, 1.442695
  %v1340 = vpow.pop %v1339
  %1341 = vadd.xlane.f32.xlu0 %v1340
  %v1342 = vpop.xlane.xlu0 %1341
  %v1343 = vrcp.pop %v1342
  %v1344 = vmul.f32 %v1340, %v1343
  %1345 = vst [vmem:[%s4] sm:$0xff] %v1344
  // Predicated region
  $region18: #{lstm_forward.1} parent=0 // pred_check
    _
  $region19: #{lstm_forward.1} parent=0 // pred_check_branch
    %1347 = sbr.rel (0) target = $region21
  $region20: #{lstm_forward.1} parent=0 // pred_region
    _
  $region21: #{lstm_forward.1} parent=0 // pred_fallthru
    _
  // Predicated region
  $region22: #{lstm_forward.1} parent=0 // pred_check
    _
  $region23: #{lstm_forward.1} parent=0 // pred_check_branch
    %1349 = sbr.rel (0) target = $region25
  $region24: #{lstm_forward.1} parent=0 // pred_region
    _
  $region25: #{lstm_forward.1} parent=0 // pred_fallthru
    _

</llo_original>
